<compile_context>
chip_gen: v5e
topology: v5e:2x2
jax: 0.10.0
libtpu: 0.0.40
codegen_flags: <defaults>
</compile_context>

<pallas_src>
import math

import jax
import jax.numpy as jnp
from jax import lax
from jax.experimental import pallas as pl
from jax.experimental.pallas import tpu as pltpu


def _gelu_exact(x):
    # F.gelu default in PyTorch is the exact (erf) formulation.
    return 0.5 * x * (1.0 + lax.erf(x * (1.0 / math.sqrt(2.0))))


def feedforward_kernel(x_ref, top_ref, bot_ref, w1_ref, wd_ref, w2_ref,
                       out_ref, h_ref):
    # x_ref   : (1, TH*W, C) bf16   centre rows of this tile (auto-pipelined)
    # top_ref : (1, W, C)    bf16   spatial row ti*TH-1 (clamped at the border)
    # bot_ref : (1, W, C)    bf16   spatial row (ti+1)*TH (clamped at the border)
    # w1_ref  : (C, F) bf16 ; wd_ref : (3, 3, F) f32 ; w2_ref : (F, C) bf16
    # out_ref : (1, TH*W, C) f32
    # h_ref   : ((TH+2)*W, F) f32 scratch — GELU(conv1) incl. one halo row/side
    i = pl.program_id(1)
    n_i = pl.num_programs(1)

    w = top_ref.shape[1]
    f = w1_ref.shape[1]
    thw = x_ref.shape[1]
    th = thw // w
    rows = thw + 2 * w

    w1 = w1_ref[...]

    # ---- pointwise conv #1 + exact GELU -------------------------------------
    # Centre rows: one large-M MXU matmul straight from the pipelined block.
    h_ref[pl.ds(w, thw)] = _gelu_exact(
        jnp.dot(x_ref[0], w1, preferred_element_type=jnp.float32))

    # Halo rows: zero at the image border (GELU(0)=0, no bias, so the
    # depthwise conv sees a correctly zero-padded intermediate); otherwise
    # conv1+GELU of the prefetched neighbour row.
    @pl.when(i == 0)
    def _():
        h_ref[pl.ds(0, w)] = jnp.zeros((w, f), jnp.float32)

    @pl.when(i > 0)
    def _():
        h_ref[pl.ds(0, w)] = _gelu_exact(
            jnp.dot(top_ref[0], w1, preferred_element_type=jnp.float32))

    @pl.when(i == n_i - 1)
    def _():
        h_ref[pl.ds(thw + w, w)] = jnp.zeros((w, f), jnp.float32)

    @pl.when(i < n_i - 1)
    def _():
        h_ref[pl.ds(thw + w, w)] = _gelu_exact(
            jnp.dot(bot_ref[0], w1, preferred_element_type=jnp.float32))

    # ---- depthwise 3x3 conv (padding=1) + exact GELU -------------------------
    wd = wd_ref[...]                                    # (3, 3, F) f32
    h2d = h_ref[...]                                    # (rows, F) f32
    col = lax.broadcasted_iota(jnp.int32, (1, w, f), 1)

    # dx = 0 (centre column); dy shifts are leading-axis slices (no relayout).
    hid = h2d.reshape(th + 2, w, f)
    acc = hid[0:th] * wd[0, 1]
    acc = acc + hid[1:th + 1] * wd[1, 1]
    acc = acc + hid[2:th + 2] * wd[2, 1]

    # dx = -1 : left neighbour via a +1 XLU roll of the flattened plane; the
    # wrapped values only land in column 0 whose true out-of-image value is 0.
    hl = pltpu.roll(h2d, 1, 0).reshape(th + 2, w, f)
    hl = jnp.where(col == 0, 0.0, hl)
    acc = acc + hl[0:th] * wd[0, 0]
    acc = acc + hl[1:th + 1] * wd[1, 0]
    acc = acc + hl[2:th + 2] * wd[2, 0]

    # dx = +1 : right neighbour (roll by -1), masked at the last column.
    # Built after hl's taps so only one rolled copy is live at a time.
    hr = pltpu.roll(h2d, rows - 1, 0).reshape(th + 2, w, f)
    hr = jnp.where(col == w - 1, 0.0, hr)
    acc = acc + hr[0:th] * wd[0, 2]
    acc = acc + hr[1:th + 1] * wd[1, 2]
    acc = acc + hr[2:th + 2] * wd[2, 2]

    acc = _gelu_exact(acc)                              # (TH, W, F) f32

    # ---- pointwise conv #2 back to C channels --------------------------------
    out2d = jnp.dot(acc.reshape(thw, f).astype(jnp.bfloat16), w2_ref[...],
                    preferred_element_type=jnp.float32)  # (TH*W, C) f32
    out_ref[0] = out2d.astype(out_ref.dtype)


def _tpu_vmem_capacity_bytes():
    try:
        return int(pltpu.get_tpu_info().vmem_capacity_bytes)
    except Exception:
        return 64 * 1024 * 1024       # assume the most constrained (v7x per-core)


def _live_bytes(th, w, c, f):
    # Dominant per-grid-step VMEM live set (bytes):
    #   h scratch + one rolled copy + acc + tap slack ~ 4 x (TH+2, W, F) f32
    #   x block (bf16, 2x buffered), out block (f32, 2x buffered), out2d, weights
    big = 4 * (th + 2) * w * f * 4
    io = th * w * c * (2 * 2 + 2 * 4 + 4)
    wts = 2 * (2 * c * f * 2 + 9 * f * 4)
    halo = 2 * 2 * w * c * 2
    return big + io + wts + halo


def _pick_tile_rows(h, w, c, f, budget_bytes):
    th = 1
    while th < h and _live_bytes(th + 1, w, c, f) <= budget_bytes:
        th += 1
    if th >= h:
        return h
    # Prefer a divisor of H (no row padding) unless it is much smaller than the cap.
    best = max(d for d in range(1, th + 1) if h % d == 0)
    return best if 2 * best >= th else th


def feedforward_pallas(x, w1, wd, w2, *, tile_rows=None, vmem_budget_bytes=None):
    """x: (B, H, W, C) NHWC float32; w1: (C, F); wd: (3, 3, F); w2: (F, C)."""
    b, h, w, c = x.shape
    f = w1.shape[1]
    if w % 8 != 0:
        raise ValueError("W must be a multiple of 8 for this TPU kernel layout")

    cap = _tpu_vmem_capacity_bytes()
    if vmem_budget_bytes is None:
        # Conservative working-set budget: safe on v7x (64 MiB VMEM), larger
        # tiles are still far past the per-step-overhead / halo-recompute knee.
        vmem_budget_bytes = min(int(cap * 0.35), 40 * 1024 * 1024)

    if tile_rows is None:
        th = _pick_tile_rows(h, w, c, f, vmem_budget_bytes)
    else:
        th = max(1, min(int(tile_rows), h))

    n_th = pl.cdiv(h, th)
    h_pad = n_th * th

    xf = x
    if h_pad != h:                      # rare: awkward H -> tiny zero row-pad
        xf = jnp.pad(xf, ((0, 0), (0, h_pad - h), (0, 0), (0, 0)))

    # Present x / out flattened (B, H*W, C): free metadata reshape, and the
    # kernel never has to reshape the bf16 input or the output block.
    xb = xf.reshape(b, h_pad * w, c).astype(jnp.bfloat16)
    w1b = w1.astype(jnp.bfloat16)       # MXU operands bf16, f32 accumulation
    w2b = w2.astype(jnp.bfloat16)
    wd32 = wd.astype(jnp.float32)       # depthwise taps stay f32 (v5e-safe VPU)

    est = _live_bytes(th, w, c, f)
    vmem_limit = int(min(0.9 * cap, max(32 * 1024 * 1024, 1.5 * est)))

    out = pl.pallas_call(
        feedforward_kernel,
        out_shape=jax.ShapeDtypeStruct((b, h_pad * w, c), jnp.float32),
        grid_spec=pltpu.PrefetchScalarGridSpec(
            num_scalar_prefetch=0,
            grid=(b, n_th),
            in_specs=[
                # centre rows of the tile
                pl.BlockSpec((1, th * w, c), lambda bi, ti: (bi, ti, 0)),
                # top halo row (clamped; zero-overridden at the image border)
                pl.BlockSpec((1, w, c),
                             lambda bi, ti: (bi, jnp.maximum(ti * th - 1, 0), 0)),
                # bottom halo row (clamped; zero-overridden at the image border)
                pl.BlockSpec((1, w, c),
                             lambda bi, ti: (bi, jnp.minimum((ti + 1) * th,
                                                             h_pad - 1), 0)),
                pl.BlockSpec((c, f), lambda bi, ti: (0, 0)),
                pl.BlockSpec((3, 3, f), lambda bi, ti: (0, 0, 0)),
                pl.BlockSpec((f, c), lambda bi, ti: (0, 0)),
            ],
            out_specs=pl.BlockSpec((1, th * w, c), lambda bi, ti: (bi, ti, 0)),
            scratch_shapes=[pltpu.VMEM(((th + 2) * w, f), jnp.float32)],
        ),
        compiler_params=pltpu.CompilerParams(
            dimension_semantics=("parallel", "parallel"),
            vmem_limit_bytes=vmem_limit),
    )(xb, xb, xb, w1b, wd32, w2b)

    out = out.reshape(b, h_pad, w, c)
    if h_pad != h:
        out = out[:, :h]
    return out


def feedforward_ref(x, w1, wd, w2):
    """Pure-JAX f32 reference (same NHWC semantics as the PyTorch module)."""
    hid = _gelu_exact(jnp.einsum('bhwc,cf->bhwf', x, w1))
    b, h, w, f = hid.shape
    hp = jnp.pad(hid, ((0, 0), (1, 1), (1, 1), (0, 0)))
    acc = jnp.zeros_like(hid)
    for dy in range(3):
        for dx in range(3):
            acc = acc + hp[:, dy:dy + h, dx:dx + w, :] * wd[dy, dx, :]
    acc = _gelu_exact(acc)
    return jnp.einsum('bhwf,fc->bhwc', acc, w2)


if __name__ == "__main__":
    # FeedForward(dim=4, mult=4); small NHWC input.
    B, H, W, DIM, MULT = 2, 16, 16, 4, 4
    F = DIM * MULT

    key = jax.random.PRNGKey(0)
    kx, k1, k2, k3 = jax.random.split(key, 4)

    x = jax.random.normal(kx, (B, H, W, DIM), dtype=jnp.float32)

    # Deterministic kaiming-uniform-style init (matches PyTorch shapes).
    b1 = 1.0 / math.sqrt(DIM * 1 * 1)        # conv1 fan_in
    bd = 1.0 / math.sqrt(1 * 3 * 3)          # depthwise fan_in
    b2 = 1.0 / math.sqrt(F * 1 * 1)          # conv3 fan_in
    w1 = jax.random.uniform(k1, (DIM, F), jnp.float32, -b1, b1)
    wd = jax.random.uniform(k2, (3, 3, F), jnp.float32, -bd, bd)
    w2 = jax.random.uniform(k3, (F, DIM), jnp.float32, -b2, b2)

    ref = feedforward_ref(x, w1, wd, w2)

    # Explicit small tile -> grid (2, 2): exercises the pipelined-halo path.
    out = jax.block_until_ready(feedforward_pallas(x, w1, wd, w2, tile_rows=8))
    assert out.shape == (B, H, W, DIM)
    max_err = float(jnp.max(jnp.abs(out - ref)))
    # bf16 MXU operands (f32 accumulation) => loosened tolerance vs f32 ref.
    assert jnp.allclose(out, ref, atol=5e-2, rtol=5e-2), (
        f"mismatch vs reference (max abs err {max_err})")

    # Auto (VMEM-budgeted) tile selection: whole image per step at this size.
    out2 = jax.block_until_ready(feedforward_pallas(x, w1, wd, w2))
    max_err2 = float(jnp.max(jnp.abs(out2 - ref)))
    assert jnp.allclose(out2, ref, atol=5e-2, rtol=5e-2), (
        f"mismatch vs reference, auto tile (max abs err {max_err2})")

    print("KERNEL_OK")
</pallas_src>

<mosaic_0001>
module attributes {stable_mosaic.version = 11 : i64} {
  func.func @feedforward_kernel(%arg0: i32, %arg1: i32, %arg2: memref<1x128x4xbf16, #tpu.memory_space<vmem>>, %arg3: memref<1x16x4xbf16, #tpu.memory_space<vmem>>, %arg4: memref<1x16x4xbf16, #tpu.memory_space<vmem>>, %arg5: memref<4x16xbf16, #tpu.memory_space<vmem>>, %arg6: memref<3x3x16xf32, #tpu.memory_space<vmem>>, %arg7: memref<16x4xbf16, #tpu.memory_space<vmem>>, %arg8: memref<1x128x4xf32, #tpu.memory_space<vmem>>, %arg9: memref<160x16xf32, #tpu.memory_space<vmem>>) attributes {dimension_semantics = [#tpu.dimension_semantics<parallel>, #tpu.dimension_semantics<parallel>], iteration_bounds = array<i64: 2, 2>, scalar_prefetch = 0 : i64, scratch_operands = 1 : i64, tpu.core_type = #tpu.core_type<tc>, window_params = [{transform_indices = @transform_0, window_bounds = array<i64: 1, 128, 4>}, {transform_indices = @transform_1, window_bounds = array<i64: 1, 16, 4>}, {transform_indices = @transform_2, window_bounds = array<i64: 1, 16, 4>}, {pipeline_mode = #tpu.pipeline_mode<synchronous>, transform_indices = @transform_3, window_bounds = array<i64: 4, 16>}, {pipeline_mode = #tpu.pipeline_mode<synchronous>, transform_indices = @transform_4, window_bounds = array<i64: 3, 3, 16>}, {pipeline_mode = #tpu.pipeline_mode<synchronous>, transform_indices = @transform_5, window_bounds = array<i64: 16, 4>}, {transform_indices = @transform_6, window_bounds = array<i64: 1, 128, 4>}]} {
    %c0 = arith.constant 0 : index
    %c0_0 = arith.constant 0 : index
    %0 = vector.load %arg5[%c0, %c0_0] : memref<4x16xbf16, #tpu.memory_space<vmem>>, vector<4x16xbf16>
    %c0_1 = arith.constant 0 : index
    %c0_2 = arith.constant 0 : index
    %c0_3 = arith.constant 0 : index
    %1 = vector.load %arg2[%c0_1, %c0_2, %c0_3] : memref<1x128x4xbf16, #tpu.memory_space<vmem>>, vector<1x128x4xbf16>
    %2 = vector.shape_cast %1 : vector<1x128x4xbf16> to vector<128x4xbf16>
    %cst = arith.constant dense<0.000000e+00> : vector<128x16xf32>
    %3 = tpu.matmul %2, %0, %cst {dimension_numbers = #tpu.dot_dimension_numbers<[1], [0], [0], [1], [0, 0, 1, 1], [], []>} : vector<128x4xbf16>, vector<4x16xbf16>, vector<128x16xf32> -> vector<128x16xf32>
    %cst_4 = arith.constant 5.000000e-01 : f32
    %4 = vector.broadcast %cst_4 : f32 to vector<128x16xf32>
    %5 = arith.mulf %4, %3 : vector<128x16xf32>
    %cst_5 = arith.constant 0.707106769 : f32
    %6 = vector.broadcast %cst_5 : f32 to vector<128x16xf32>
    %7 = arith.mulf %3, %6 : vector<128x16xf32>
    %8 = math.erf %7 : vector<128x16xf32>
    %cst_6 = arith.constant 1.000000e+00 : f32
    %9 = vector.broadcast %cst_6 : f32 to vector<128x16xf32>
    %10 = arith.addf %9, %8 : vector<128x16xf32>
    %11 = arith.mulf %5, %10 : vector<128x16xf32>
    %c16 = arith.constant 16 : index
    %c0_7 = arith.constant 0 : index
    %12 = vector.load %arg9[%c16, %c0_7] : memref<160x16xf32, #tpu.memory_space<vmem>>, vector<128x16xf32>
    tpu.vector_store %arg9[%c16, %c0_7], %11 {strides = array<i32>} : memref<160x16xf32, #tpu.memory_space<vmem>>, vector<128x16xf32>,
    %c0_i32 = arith.constant 0 : i32
    %13 = arith.cmpi eq, %arg1, %c0_i32 : i32
    %14 = arith.extui %13 : i1 to i32
    %c0_i32_8 = arith.constant 0 : i32
    %15 = arith.cmpi ne, %14, %c0_i32_8 : i32
    scf.if %15 {
      %cst_32 = arith.constant 0.000000e+00 : f32
      %122 = vector.broadcast %cst_32 : f32 to vector<16x16xf32>
      %c0_33 = arith.constant 0 : index
      %c0_34 = arith.constant 0 : index
      %123 = vector.load %arg9[%c0_33, %c0_34] : memref<160x16xf32, #tpu.memory_space<vmem>>, vector<16x16xf32>
      tpu.vector_store %arg9[%c0_33, %c0_34], %122 {strides = array<i32>} : memref<160x16xf32, #tpu.memory_space<vmem>>, vector<16x16xf32>,
    } else {
    }
    %c0_i32_9 = arith.constant 0 : i32
    %16 = arith.cmpi sgt, %arg1, %c0_i32_9 : i32
    %17 = arith.extui %16 : i1 to i32
    %c0_i32_10 = arith.constant 0 : i32
    %18 = arith.cmpi ne, %17, %c0_i32_10 : i32
    scf.if %18 {
      %c0_32 = arith.constant 0 : index
      %c0_33 = arith.constant 0 : index
      %c0_34 = arith.constant 0 : index
      %122 = vector.load %arg3[%c0_32, %c0_33, %c0_34] : memref<1x16x4xbf16, #tpu.memory_space<vmem>>, vector<1x16x4xbf16>
      %123 = vector.shape_cast %122 : vector<1x16x4xbf16> to vector<16x4xbf16>
      %cst_35 = arith.constant dense<0.000000e+00> : vector<16x16xf32>
      %124 = tpu.matmul %123, %0, %cst_35 {dimension_numbers = #tpu.dot_dimension_numbers<[1], [0], [0], [1], [0, 0, 1, 1], [], []>} : vector<16x4xbf16>, vector<4x16xbf16>, vector<16x16xf32> -> vector<16x16xf32>
      %cst_36 = arith.constant 5.000000e-01 : f32
      %125 = vector.broadcast %cst_36 : f32 to vector<16x16xf32>
      %126 = arith.mulf %125, %124 : vector<16x16xf32>
      %cst_37 = arith.constant 0.707106769 : f32
      %127 = vector.broadcast %cst_37 : f32 to vector<16x16xf32>
      %128 = arith.mulf %124, %127 : vector<16x16xf32>
      %129 = math.erf %128 : vector<16x16xf32>
      %cst_38 = arith.constant 1.000000e+00 : f32
      %130 = vector.broadcast %cst_38 : f32 to vector<16x16xf32>
      %131 = arith.addf %130, %129 : vector<16x16xf32>
      %132 = arith.mulf %126, %131 : vector<16x16xf32>
      %c0_39 = arith.constant 0 : index
      %c0_40 = arith.constant 0 : index
      %133 = vector.load %arg9[%c0_39, %c0_40] : memref<160x16xf32, #tpu.memory_space<vmem>>, vector<16x16xf32>
      tpu.vector_store %arg9[%c0_39, %c0_40], %132 {strides = array<i32>} : memref<160x16xf32, #tpu.memory_space<vmem>>, vector<16x16xf32>,
    } else {
    }
    %c1_i32 = arith.constant 1 : i32
    %19 = arith.cmpi eq, %arg1, %c1_i32 : i32
    %20 = arith.extui %19 : i1 to i32
    %c0_i32_11 = arith.constant 0 : i32
    %21 = arith.cmpi ne, %20, %c0_i32_11 : i32
    scf.if %21 {
      %cst_32 = arith.constant 0.000000e+00 : f32
      %122 = vector.broadcast %cst_32 : f32 to vector<16x16xf32>
      %c144 = arith.constant 144 : index
      %c0_33 = arith.constant 0 : index
      %123 = vector.load %arg9[%c144, %c0_33] : memref<160x16xf32, #tpu.memory_space<vmem>>, vector<16x16xf32>
      tpu.vector_store %arg9[%c144, %c0_33], %122 {strides = array<i32>} : memref<160x16xf32, #tpu.memory_space<vmem>>, vector<16x16xf32>,
    } else {
    }
    %c1_i32_12 = arith.constant 1 : i32
    %22 = arith.cmpi slt, %arg1, %c1_i32_12 : i32
    %23 = arith.extui %22 : i1 to i32
    %c0_i32_13 = arith.constant 0 : i32
    %24 = arith.cmpi ne, %23, %c0_i32_13 : i32
    scf.if %24 {
      %c0_32 = arith.constant 0 : index
      %c0_33 = arith.constant 0 : index
      %c0_34 = arith.constant 0 : index
      %122 = vector.load %arg4[%c0_32, %c0_33, %c0_34] : memref<1x16x4xbf16, #tpu.memory_space<vmem>>, vector<1x16x4xbf16>
      %123 = vector.shape_cast %122 : vector<1x16x4xbf16> to vector<16x4xbf16>
      %cst_35 = arith.constant dense<0.000000e+00> : vector<16x16xf32>
      %124 = tpu.matmul %123, %0, %cst_35 {dimension_numbers = #tpu.dot_dimension_numbers<[1], [0], [0], [1], [0, 0, 1, 1], [], []>} : vector<16x4xbf16>, vector<4x16xbf16>, vector<16x16xf32> -> vector<16x16xf32>
      %cst_36 = arith.constant 5.000000e-01 : f32
      %125 = vector.broadcast %cst_36 : f32 to vector<16x16xf32>
      %126 = arith.mulf %125, %124 : vector<16x16xf32>
      %cst_37 = arith.constant 0.707106769 : f32
      %127 = vector.broadcast %cst_37 : f32 to vector<16x16xf32>
      %128 = arith.mulf %124, %127 : vector<16x16xf32>
      %129 = math.erf %128 : vector<16x16xf32>
      %cst_38 = arith.constant 1.000000e+00 : f32
      %130 = vector.broadcast %cst_38 : f32 to vector<16x16xf32>
      %131 = arith.addf %130, %129 : vector<16x16xf32>
      %132 = arith.mulf %126, %131 : vector<16x16xf32>
      %c144 = arith.constant 144 : index
      %c0_39 = arith.constant 0 : index
      %133 = vector.load %arg9[%c144, %c0_39] : memref<160x16xf32, #tpu.memory_space<vmem>>, vector<16x16xf32>
      tpu.vector_store %arg9[%c144, %c0_39], %132 {strides = array<i32>} : memref<160x16xf32, #tpu.memory_space<vmem>>, vector<16x16xf32>,
    } else {
    }
    %c0_14 = arith.constant 0 : index
    %c0_15 = arith.constant 0 : index
    %c0_16 = arith.constant 0 : index
    %25 = vector.load %arg6[%c0_14, %c0_15, %c0_16] : memref<3x3x16xf32, #tpu.memory_space<vmem>>, vector<3x3x16xf32>
    %c0_17 = arith.constant 0 : index
    %c0_18 = arith.constant 0 : index
    %26 = vector.load %arg9[%c0_17, %c0_18] : memref<160x16xf32, #tpu.memory_space<vmem>>, vector<160x16xf32>
    %27 = tpu.iota {dimensions = array<i32: 1>} : vector<1x16x16xi32>
    %28 = vector.shape_cast %26 : vector<160x16xf32> to vector<10x16x16xf32>
    %29 = vector.extract_strided_slice %28 {offsets = [0, 0, 0], sizes = [8, 16, 16], strides = [1, 1, 1]} : vector<10x16x16xf32> to vector<8x16x16xf32>
    %30 = vector.extract_strided_slice %25 {offsets = [0, 1, 0], sizes = [1, 1, 16], strides = [1, 1, 1]} : vector<3x3x16xf32> to vector<1x1x16xf32>
    %31 = vector.shape_cast %30 : vector<1x1x16xf32> to vector<16xf32>
    %32 = vector.shape_cast %31 : vector<16xf32> to vector<1x1x16xf32>
    %33 = vector.broadcast %32 : vector<1x1x16xf32> to vector<8x16x16xf32>
    %34 = arith.mulf %29, %33 : vector<8x16x16xf32>
    %35 = vector.extract_strided_slice %28 {offsets = [1, 0, 0], sizes = [8, 16, 16], strides = [1, 1, 1]} : vector<10x16x16xf32> to vector<8x16x16xf32>
    %36 = vector.extract_strided_slice %25 {offsets = [1, 1, 0], sizes = [1, 1, 16], strides = [1, 1, 1]} : vector<3x3x16xf32> to vector<1x1x16xf32>
    %37 = vector.shape_cast %36 : vector<1x1x16xf32> to vector<16xf32>
    %38 = vector.shape_cast %37 : vector<16xf32> to vector<1x1x16xf32>
    %39 = vector.broadcast %38 : vector<1x1x16xf32> to vector<8x16x16xf32>
    %40 = arith.mulf %35, %39 : vector<8x16x16xf32>
    %41 = arith.addf %34, %40 : vector<8x16x16xf32>
    %42 = vector.extract_strided_slice %28 {offsets = [2, 0, 0], sizes = [8, 16, 16], strides = [1, 1, 1]} : vector<10x16x16xf32> to vector<8x16x16xf32>
    %43 = vector.extract_strided_slice %25 {offsets = [2, 1, 0], sizes = [1, 1, 16], strides = [1, 1, 1]} : vector<3x3x16xf32> to vector<1x1x16xf32>
    %44 = vector.shape_cast %43 : vector<1x1x16xf32> to vector<16xf32>
    %45 = vector.shape_cast %44 : vector<16xf32> to vector<1x1x16xf32>
    %46 = vector.broadcast %45 : vector<1x1x16xf32> to vector<8x16x16xf32>
    %47 = arith.mulf %42, %46 : vector<8x16x16xf32>
    %48 = arith.addf %41, %47 : vector<8x16x16xf32>
    %c1_i32_19 = arith.constant 1 : i32
    %49 = tpu.dynamic_rotate %26 by %c1_i32_19 dim 0 : vector<160x16xf32>, i32 -> vector<160x16xf32>
    %50 = vector.shape_cast %49 : vector<160x16xf32> to vector<10x16x16xf32>
    %c0_i32_20 = arith.constant 0 : i32
    %51 = vector.broadcast %c0_i32_20 : i32 to vector<1x16x16xi32>
    %52 = arith.cmpi eq, %27, %51 : vector<1x16x16xi32>
    %cst_21 = arith.constant 0.000000e+00 : f32
    %53 = vector.shape_cast %52 : vector<1x16x16xi1> to vector<1x16x16xi1>
    %54 = vector.broadcast %53 : vector<1x16x16xi1> to vector<10x16x16xi1>
    %55 = vector.broadcast %cst_21 : f32 to vector<10x16x16xf32>
    %56 = arith.select %54, %55, %50 : vector<10x16x16xi1>, vector<10x16x16xf32>
    %57 = vector.extract_strided_slice %56 {offsets = [0, 0, 0], sizes = [8, 16, 16], strides = [1, 1, 1]} : vector<10x16x16xf32> to vector<8x16x16xf32>
    %58 = vector.extract_strided_slice %25 {offsets = [0, 0, 0], sizes = [1, 1, 16], strides = [1, 1, 1]} : vector<3x3x16xf32> to vector<1x1x16xf32>
    %59 = vector.shape_cast %58 : vector<1x1x16xf32> to vector<16xf32>
    %60 = vector.shape_cast %59 : vector<16xf32> to vector<1x1x16xf32>
    %61 = vector.broadcast %60 : vector<1x1x16xf32> to vector<8x16x16xf32>
    %62 = arith.mulf %57, %61 : vector<8x16x16xf32>
    %63 = arith.addf %48, %62 : vector<8x16x16xf32>
    %64 = vector.extract_strided_slice %56 {offsets = [1, 0, 0], sizes = [8, 16, 16], strides = [1, 1, 1]} : vector<10x16x16xf32> to vector<8x16x16xf32>
    %65 = vector.extract_strided_slice %25 {offsets = [1, 0, 0], sizes = [1, 1, 16], strides = [1, 1, 1]} : vector<3x3x16xf32> to vector<1x1x16xf32>
    %66 = vector.shape_cast %65 : vector<1x1x16xf32> to vector<16xf32>
    %67 = vector.shape_cast %66 : vector<16xf32> to vector<1x1x16xf32>
    %68 = vector.broadcast %67 : vector<1x1x16xf32> to vector<8x16x16xf32>
    %69 = arith.mulf %64, %68 : vector<8x16x16xf32>
    %70 = arith.addf %63, %69 : vector<8x16x16xf32>
    %71 = vector.extract_strided_slice %56 {offsets = [2, 0, 0], sizes = [8, 16, 16], strides = [1, 1, 1]} : vector<10x16x16xf32> to vector<8x16x16xf32>
    %72 = vector.extract_strided_slice %25 {offsets = [2, 0, 0], sizes = [1, 1, 16], strides = [1, 1, 1]} : vector<3x3x16xf32> to vector<1x1x16xf32>
    %73 = vector.shape_cast %72 : vector<1x1x16xf32> to vector<16xf32>
    %74 = vector.shape_cast %73 : vector<16xf32> to vector<1x1x16xf32>
    %75 = vector.broadcast %74 : vector<1x1x16xf32> to vector<8x16x16xf32>
    %76 = arith.mulf %71, %75 : vector<8x16x16xf32>
    %77 = arith.addf %70, %76 : vector<8x16x16xf32>
    %c159_i32 = arith.constant 159 : i32
    %78 = tpu.dynamic_rotate %26 by %c159_i32 dim 0 : vector<160x16xf32>, i32 -> vector<160x16xf32>
    %79 = vector.shape_cast %78 : vector<160x16xf32> to vector<10x16x16xf32>
    %c15_i32 = arith.constant 15 : i32
    %80 = vector.broadcast %c15_i32 : i32 to vector<1x16x16xi32>
    %81 = arith.cmpi eq, %27, %80 : vector<1x16x16xi32>
    %cst_22 = arith.constant 0.000000e+00 : f32
    %82 = vector.shape_cast %81 : vector<1x16x16xi1> to vector<1x16x16xi1>
    %83 = vector.broadcast %82 : vector<1x16x16xi1> to vector<10x16x16xi1>
    %84 = vector.broadcast %cst_22 : f32 to vector<10x16x16xf32>
    %85 = arith.select %83, %84, %79 : vector<10x16x16xi1>, vector<10x16x16xf32>
    %86 = vector.extract_strided_slice %85 {offsets = [0, 0, 0], sizes = [8, 16, 16], strides = [1, 1, 1]} : vector<10x16x16xf32> to vector<8x16x16xf32>
    %87 = vector.extract_strided_slice %25 {offsets = [0, 2, 0], sizes = [1, 1, 16], strides = [1, 1, 1]} : vector<3x3x16xf32> to vector<1x1x16xf32>
    %88 = vector.shape_cast %87 : vector<1x1x16xf32> to vector<16xf32>
    %89 = vector.shape_cast %88 : vector<16xf32> to vector<1x1x16xf32>
    %90 = vector.broadcast %89 : vector<1x1x16xf32> to vector<8x16x16xf32>
    %91 = arith.mulf %86, %90 : vector<8x16x16xf32>
    %92 = arith.addf %77, %91 : vector<8x16x16xf32>
    %93 = vector.extract_strided_slice %85 {offsets = [1, 0, 0], sizes = [8, 16, 16], strides = [1, 1, 1]} : vector<10x16x16xf32> to vector<8x16x16xf32>
    %94 = vector.extract_strided_slice %25 {offsets = [1, 2, 0], sizes = [1, 1, 16], strides = [1, 1, 1]} : vector<3x3x16xf32> to vector<1x1x16xf32>
    %95 = vector.shape_cast %94 : vector<1x1x16xf32> to vector<16xf32>
    %96 = vector.shape_cast %95 : vector<16xf32> to vector<1x1x16xf32>
    %97 = vector.broadcast %96 : vector<1x1x16xf32> to vector<8x16x16xf32>
    %98 = arith.mulf %93, %97 : vector<8x16x16xf32>
    %99 = arith.addf %92, %98 : vector<8x16x16xf32>
    %100 = vector.extract_strided_slice %85 {offsets = [2, 0, 0], sizes = [8, 16, 16], strides = [1, 1, 1]} : vector<10x16x16xf32> to vector<8x16x16xf32>
    %101 = vector.extract_strided_slice %25 {offsets = [2, 2, 0], sizes = [1, 1, 16], strides = [1, 1, 1]} : vector<3x3x16xf32> to vector<1x1x16xf32>
    %102 = vector.shape_cast %101 : vector<1x1x16xf32> to vector<16xf32>
    %103 = vector.shape_cast %102 : vector<16xf32> to vector<1x1x16xf32>
    %104 = vector.broadcast %103 : vector<1x1x16xf32> to vector<8x16x16xf32>
    %105 = arith.mulf %100, %104 : vector<8x16x16xf32>
    %106 = arith.addf %99, %105 : vector<8x16x16xf32>
    %cst_23 = arith.constant 5.000000e-01 : f32
    %107 = vector.broadcast %cst_23 : f32 to vector<8x16x16xf32>
    %108 = arith.mulf %107, %106 : vector<8x16x16xf32>
    %cst_24 = arith.constant 0.707106769 : f32
    %109 = vector.broadcast %cst_24 : f32 to vector<8x16x16xf32>
    %110 = arith.mulf %106, %109 : vector<8x16x16xf32>
    %111 = math.erf %110 : vector<8x16x16xf32>
    %cst_25 = arith.constant 1.000000e+00 : f32
    %112 = vector.broadcast %cst_25 : f32 to vector<8x16x16xf32>
    %113 = arith.addf %112, %111 : vector<8x16x16xf32>
    %114 = arith.mulf %108, %113 : vector<8x16x16xf32>
    %115 = vector.shape_cast %114 : vector<8x16x16xf32> to vector<128x16xf32>
    %116 = arith.truncf %115 : vector<128x16xf32> to vector<128x16xbf16>
    %c0_26 = arith.constant 0 : index
    %c0_27 = arith.constant 0 : index
    %117 = vector.load %arg7[%c0_26, %c0_27] : memref<16x4xbf16, #tpu.memory_space<vmem>>, vector<16x4xbf16>
    %cst_28 = arith.constant dense<0.000000e+00> : vector<128x4xf32>
    %118 = tpu.matmul %116, %117, %cst_28 {dimension_numbers = #tpu.dot_dimension_numbers<[1], [0], [0], [1], [0, 0, 1, 1], [], []>} : vector<128x16xbf16>, vector<16x4xbf16>, vector<128x4xf32> -> vector<128x4xf32>
    %c0_29 = arith.constant 0 : index
    %c0_30 = arith.constant 0 : index
    %c0_31 = arith.constant 0 : index
    %119 = vector.load %arg8[%c0_29, %c0_30, %c0_31] : memref<1x128x4xf32, #tpu.memory_space<vmem>>, vector<1x128x4xf32>
    %120 = vector.shape_cast %119 : vector<1x128x4xf32> to vector<128x4xf32>
    %121 = vector.shape_cast %118 : vector<128x4xf32> to vector<1x128x4xf32>
    tpu.vector_store %arg8[%c0_29, %c0_30, %c0_31], %121 {strides = array<i32>} : memref<1x128x4xf32, #tpu.memory_space<vmem>>, vector<1x128x4xf32>,
    return
  }
  func.func @transform_0(%arg0: i32, %arg1: i32) -> (i32, i32, i32) {
    %c0_i32 = arith.constant 0 : i32
    %c0_i32_0 = arith.constant 0 : i32
    return %arg0, %arg1, %c0_i32 : i32, i32, i32
  }
  func.func @transform_1(%arg0: i32, %arg1: i32) -> (i32, i32, i32) {
    %c8_i32 = arith.constant 8 : i32
    %0 = arith.muli %arg1, %c8_i32 : i32
    %c1_i32 = arith.constant 1 : i32
    %1 = arith.subi %0, %c1_i32 : i32
    %c0_i32 = arith.constant 0 : i32
    %2 = arith.maxsi %1, %c0_i32 : i32
    %c0_i32_0 = arith.constant 0 : i32
    %c0_i32_1 = arith.constant 0 : i32
    return %arg0, %2, %c0_i32_0 : i32, i32, i32
  }
  func.func @transform_2(%arg0: i32, %arg1: i32) -> (i32, i32, i32) {
    %c1_i32 = arith.constant 1 : i32
    %0 = arith.addi %arg1, %c1_i32 : i32
    %c8_i32 = arith.constant 8 : i32
    %1 = arith.muli %0, %c8_i32 : i32
    %c15_i32 = arith.constant 15 : i32
    %2 = arith.minsi %1, %c15_i32 : i32
    %c0_i32 = arith.constant 0 : i32
    %c0_i32_0 = arith.constant 0 : i32
    return %arg0, %2, %c0_i32 : i32, i32, i32
  }
  func.func @transform_3(%arg0: i32, %arg1: i32) -> (i32, i32) {
    %c0_i32 = arith.constant 0 : i32
    %c0_i32_0 = arith.constant 0 : i32
    %c0_i32_1 = arith.constant 0 : i32
    return %c0_i32, %c0_i32_0 : i32, i32
  }
  func.func @transform_4(%arg0: i32, %arg1: i32) -> (i32, i32, i32) {
    %c0_i32 = arith.constant 0 : i32
    %c0_i32_0 = arith.constant 0 : i32
    %c0_i32_1 = arith.constant 0 : i32
    %c0_i32_2 = arith.constant 0 : i32
    return %c0_i32, %c0_i32_0, %c0_i32_1 : i32, i32, i32
  }
  func.func @transform_5(%arg0: i32, %arg1: i32) -> (i32, i32) {
    %c0_i32 = arith.constant 0 : i32
    %c0_i32_0 = arith.constant 0 : i32
    %c0_i32_1 = arith.constant 0 : i32
    return %c0_i32, %c0_i32_0 : i32, i32
  }
  func.func @transform_6(%arg0: i32, %arg1: i32) -> (i32, i32, i32) {
    %c0_i32 = arith.constant 0 : i32
    %c0_i32_0 = arith.constant 0 : i32
    return %arg0, %arg1, %c0_i32 : i32, i32, i32
  }
}

</mosaic_0001>

<llo_original>
// kernel: tpu_custom_call.1
$region0: #{tpu_custom_call.1}
  #allocation0 [shape = 'u32[]', space=smem, size = 0x4, offset = 0x4, fixed_abs, tag = 'smem constant byte address 0x4 - core index']
  #allocation1 [shape = 'u32[72,128]{1,0:T(1,128)}', space=vmem, size = 0x9000, scoped, tag = 'internal scratch']
  #allocation2 [shape = 'f32[160,16]{1,0:T(8,128)}', space=vmem, size = 0x14000, scoped, tag = 'scratch operand']
  %s0 = inlined_call_operand.vmem [shape: bf16[2,256,4], index: 0, kind: input, shape index: {}]
  %s1 = inlined_call_operand.vmem [shape: bf16[2,256,4], index: 1, kind: input, shape index: {}]
  %s2 = inlined_call_operand.vmem [shape: bf16[2,256,4], index: 2, kind: input, shape index: {}]
  %s3 = inlined_call_operand.vmem [shape: bf16[4,16], index: 3, kind: input, shape index: {}]
  %s4 = inlined_call_operand.vmem [shape: f32[3,3,16], index: 4, kind: input, shape index: {}]
  %s5 = inlined_call_operand.vmem [shape: bf16[16,4], index: 5, kind: input, shape index: {}]
  %s6 = inlined_call_operand.vmem [shape: f32[2,256,4], index: 6, kind: output, shape index: {}]
  %s7 = sld [smem:[#allocation0]]
  $region73: #{tpu_custom_call.1} parent=0
    _
  %s9 = ssub.s32 1, %s7
  %s10 = scalar_select 0, %s9, %s7
  loop: start=0, step=1, limit=6
  $region2: #{tpu_custom_call.1} parent=0 // loop_pre_header
    _
  $region3: #{tpu_custom_call.1} parent=0 // loop_header
    %s12 = sphi 0, %s16
    %p13 = scmp.ge.s32.totalorder %s12, 6
    %s19 = sphi 0, %s31
    %s20 = sphi 0, %s27
    %s21 = sphi 0, %s19
    %s22 = sphi 0, %s20
    %s23 = sphi 0, %s21
    %s24 = sphi 0, %s22
    %s36 = sphi 0, %s38
    %s39 = sphi 0, %s36
    %s40 = sphi 0, %s39
    %s56 = sphi 0, %s40
    %s72 = sphi 0, %s74
    %s75 = sphi 0, %s72
    %s76 = sphi 0, %s75
    %s92 = sphi 0, %s76
    %s108 = sphi 0, %s110
    %s111 = sphi 0, %s108
    %s112 = sphi 0, %s111
    %s128 = sphi 0, %s112
    %s132 = sphi 0, %s132
    %s134 = sphi 0, %s132
    %s135 = sphi 0, %s134
    %s149 = sphi 0, %s135
    %s153 = sphi 0, %s153
    %s155 = sphi 0, %s153
    %s156 = sphi 0, %s155
    %s170 = sphi 0, %s156
    %s174 = sphi 0, %s174
    %s176 = sphi 0, %s174
    %s177 = sphi 0, %s176
    %s191 = sphi 0, %s177
    %s199 = sphi 0, %s201
    %s202 = sphi 0, %s199
    %s203 = sphi 0, %s202
    %s219 = sphi 0, %s203
  $region4: #{tpu_custom_call.1} parent=0 // loop_header_branch
    %15 = sbr.rel (%p13) target = $region8
  $region5: #{tpu_custom_call.1} parent=0 // loop_body
    %s17 = ssub.s32 %s12, 1
    %s18 = ssub.s32 %s12, 2
    %s25 = sadd.s32 1, %s20
    %p26 = scmp.ge.s32.totalorder %s25, 2
    %s27 = scalar_select %p26, 0, %s25
    %s28 = sadd.s32 1, %s19
    %s29 = scalar_select %p26, %s28, %s19
    %p30 = scmp.ge.s32.totalorder %s29, 2
    %s31 = scalar_select %p30, 0, %s29
    %s32 = ssub.s32 %s19, %s31
    %s33 = ssub.s32 %s20, %s27
    %s34 = sor.u32 %s32, %s33
    %p35 = scmp.eq.s32.totalorder %s34, 0
    %s37 = sadd.s32 %s36, 1
    %s38 = scalar_select %p35, %s36, %s37
    %p41 = pneg %p35
    %p42 = scmp.eq.s32.totalorder %s12, 3
    %p43 = por %p41, %p42
    %p44 = scmp.ne.s32.totalorder %s36, %s39
    %p45 = scmp.eq.s32.totalorder %s12, 0
    %p46 = por %p44, %p45
    %p47 = scmp.ne.s32.totalorder %s36, %s39
    %p48 = scmp.eq.s32.totalorder %s17, 3
    %p49 = por %p47, %p48
    %p50 = scmp.ne.s32.totalorder %s39, %s40
    %p51 = scmp.eq.s32.totalorder %s17, 0
    %p52 = por %p50, %p51
    %p53 = scmp.ne.s32.totalorder %s39, %s40
    %p54 = scmp.eq.s32.totalorder %s18, 3
    %p55 = por %p53, %p54
    %p57 = scmp.ne.s32.totalorder %s40, %s56
    %p58 = scmp.eq.s32.totalorder %s18, 0
    %p59 = por %p57, %p58
    %s60 = smul.u32 %s20, 8
    %s61 = ssub.s32 %s60, 1
    %p62 = scmp.gt.s32.totalorder %s61, 0
    %s63 = scalar_select %p62, %s61, 0
    %s64 = smul.u32 %s27, 8
    %s65 = ssub.s32 %s64, 1
    %p66 = scmp.gt.s32.totalorder %s65, 0
    %s67 = scalar_select %p66, %s65, 0
    %s68 = ssub.s32 %s19, %s31
    %s69 = ssub.s32 %s63, %s67
    %s70 = sor.u32 %s68, %s69
    %p71 = scmp.eq.s32.totalorder %s70, 0
    %s73 = sadd.s32 %s72, 1
    %s74 = scalar_select %p71, %s72, %s73
    %p77 = pneg %p71
    %p78 = scmp.eq.s32.totalorder %s12, 3
    %p79 = por %p77, %p78
    %p80 = scmp.ne.s32.totalorder %s72, %s75
    %p81 = scmp.eq.s32.totalorder %s12, 0
    %p82 = por %p80, %p81
    %p83 = scmp.ne.s32.totalorder %s72, %s75
    %p84 = scmp.eq.s32.totalorder %s17, 3
    %p85 = por %p83, %p84
    %p86 = scmp.ne.s32.totalorder %s75, %s76
    %p87 = scmp.eq.s32.totalorder %s17, 0
    %p88 = por %p86, %p87
    %p89 = scmp.ne.s32.totalorder %s75, %s76
    %p90 = scmp.eq.s32.totalorder %s18, 3
    %p91 = por %p89, %p90
    %p93 = scmp.ne.s32.totalorder %s76, %s92
    %p94 = scmp.eq.s32.totalorder %s18, 0
    %p95 = por %p93, %p94
    %s96 = sadd.s32 %s20, 1
    %s97 = smul.u32 %s96, 8
    %p98 = scmp.lt.s32.totalorder %s97, 15
    %s99 = scalar_select %p98, %s97, 15
    %s100 = sadd.s32 %s27, 1
    %s101 = smul.u32 %s100, 8
    %p102 = scmp.lt.s32.totalorder %s101, 15
    %s103 = scalar_select %p102, %s101, 15
    %s104 = ssub.s32 %s19, %s31
    %s105 = ssub.s32 %s99, %s103
    %s106 = sor.u32 %s104, %s105
    %p107 = scmp.eq.s32.totalorder %s106, 0
    %s109 = sadd.s32 %s108, 1
    %s110 = scalar_select %p107, %s108, %s109
    %p113 = pneg %p107
    %p114 = scmp.eq.s32.totalorder %s12, 3
    %p115 = por %p113, %p114
    %p116 = scmp.ne.s32.totalorder %s108, %s111
    %p117 = scmp.eq.s32.totalorder %s12, 0
    %p118 = por %p116, %p117
    %p119 = scmp.ne.s32.totalorder %s108, %s111
    %p120 = scmp.eq.s32.totalorder %s17, 3
    %p121 = por %p119, %p120
    %p122 = scmp.ne.s32.totalorder %s111, %s112
    %p123 = scmp.eq.s32.totalorder %s17, 0
    %p124 = por %p122, %p123
    %p125 = scmp.ne.s32.totalorder %s111, %s112
    %p126 = scmp.eq.s32.totalorder %s18, 3
    %p127 = por %p125, %p126
    %p129 = scmp.ne.s32.totalorder %s112, %s128
    %p130 = scmp.eq.s32.totalorder %s18, 0
    %p131 = por %p129, %p130
    %s133 = sadd.s32 %s132, 1
    %p136 = scmp.eq.s32.totalorder %s12, 3
    %p137 = scmp.ne.s32.totalorder %s132, %s134
    %p138 = scmp.eq.s32.totalorder %s12, 0
    %p139 = por %p137, %p138
    %p140 = scmp.ne.s32.totalorder %s132, %s134
    %p141 = scmp.eq.s32.totalorder %s17, 3
    %p142 = por %p140, %p141
    %p143 = scmp.ne.s32.totalorder %s134, %s135
    %p144 = scmp.eq.s32.totalorder %s17, 0
    %p145 = por %p143, %p144
    %p146 = scmp.ne.s32.totalorder %s134, %s135
    %p147 = scmp.eq.s32.totalorder %s18, 3
    %p148 = por %p146, %p147
    %p150 = scmp.ne.s32.totalorder %s135, %s149
    %p151 = scmp.eq.s32.totalorder %s18, 0
    %p152 = por %p150, %p151
    %s154 = sadd.s32 %s153, 1
    %p157 = scmp.eq.s32.totalorder %s12, 3
    %p158 = scmp.ne.s32.totalorder %s153, %s155
    %p159 = scmp.eq.s32.totalorder %s12, 0
    %p160 = por %p158, %p159
    %p161 = scmp.ne.s32.totalorder %s153, %s155
    %p162 = scmp.eq.s32.totalorder %s17, 3
    %p163 = por %p161, %p162
    %p164 = scmp.ne.s32.totalorder %s155, %s156
    %p165 = scmp.eq.s32.totalorder %s17, 0
    %p166 = por %p164, %p165
    %p167 = scmp.ne.s32.totalorder %s155, %s156
    %p168 = scmp.eq.s32.totalorder %s18, 3
    %p169 = por %p167, %p168
    %p171 = scmp.ne.s32.totalorder %s156, %s170
    %p172 = scmp.eq.s32.totalorder %s18, 0
    %p173 = por %p171, %p172
    %s175 = sadd.s32 %s174, 1
    %p178 = scmp.eq.s32.totalorder %s12, 3
    %p179 = scmp.ne.s32.totalorder %s174, %s176
    %p180 = scmp.eq.s32.totalorder %s12, 0
    %p181 = por %p179, %p180
    %p182 = scmp.ne.s32.totalorder %s174, %s176
    %p183 = scmp.eq.s32.totalorder %s17, 3
    %p184 = por %p182, %p183
    %p185 = scmp.ne.s32.totalorder %s176, %s177
    %p186 = scmp.eq.s32.totalorder %s17, 0
    %p187 = por %p185, %p186
    %p188 = scmp.ne.s32.totalorder %s176, %s177
    %p189 = scmp.eq.s32.totalorder %s18, 3
    %p190 = por %p188, %p189
    %p192 = scmp.ne.s32.totalorder %s177, %s191
    %p193 = scmp.eq.s32.totalorder %s18, 0
    %p194 = por %p192, %p193
    %s195 = ssub.s32 %s19, %s31
    %s196 = ssub.s32 %s20, %s27
    %s197 = sor.u32 %s195, %s196
    %p198 = scmp.eq.s32.totalorder %s197, 0
    %s200 = sadd.s32 %s199, 1
    %s201 = scalar_select %p198, %s199, %s200
    %p204 = pneg %p198
    %p205 = scmp.eq.s32.totalorder %s12, 3
    %p206 = por %p204, %p205
    %p207 = scmp.ne.s32.totalorder %s199, %s202
    %p208 = scmp.eq.s32.totalorder %s12, 0
    %p209 = por %p207, %p208
    %p210 = scmp.ne.s32.totalorder %s199, %s202
    %p211 = scmp.eq.s32.totalorder %s17, 3
    %p212 = por %p210, %p211
    %p213 = scmp.ne.s32.totalorder %s202, %s203
    %p214 = scmp.eq.s32.totalorder %s17, 0
    %p215 = por %p213, %p214
    %p216 = scmp.ne.s32.totalorder %s202, %s203
    %p217 = scmp.eq.s32.totalorder %s18, 3
    %p218 = por %p216, %p217
    %p220 = scmp.ne.s32.totalorder %s203, %s219
    %p221 = scmp.eq.s32.totalorder %s18, 0
    %p222 = por %p220, %p221
    %p223 = scmp.le.s32.totalorder 1, %s12
    %p224 = scmp.lt.s32.totalorder %s12, 5
    %p225 = pnand %p223, %p224
    %p226 = pneg %p225
    // Predicated region
    $region9: #{tpu_custom_call.1} parent=5 // pred_check
      _
    $region10: #{tpu_custom_call.1} parent=5 // pred_check_branch
      %228 = sbr.rel (%p225) target = $region12
    $region11: #{tpu_custom_call.1} parent=5 // pred_region
      %s229 = ssub.s32 %s12, 1
      // Predicated region
      $region13: #{tpu_custom_call.1} parent=11 // pred_check
        %p230 = pneg %p145
      $region14: #{tpu_custom_call.1} parent=11 // pred_check_branch
        %232 = sbr.rel (%p230) target = $region16
      $region15: #{tpu_custom_call.1} parent=11 // pred_region
        _
      $region16: #{tpu_custom_call.1} parent=11 // pred_fallthru
        _
      // Predicated region
      $region17: #{tpu_custom_call.1} parent=11 // pred_check
        %p233 = pneg %p166
      $region18: #{tpu_custom_call.1} parent=11 // pred_check_branch
        %235 = sbr.rel (%p233) target = $region20
      $region19: #{tpu_custom_call.1} parent=11 // pred_region
        _
      $region20: #{tpu_custom_call.1} parent=11 // pred_fallthru
        _
      // Predicated region
      $region21: #{tpu_custom_call.1} parent=11 // pred_check
        %p236 = pneg %p187
      $region22: #{tpu_custom_call.1} parent=11 // pred_check_branch
        %238 = sbr.rel (%p236) target = $region24
      $region23: #{tpu_custom_call.1} parent=11 // pred_region
        _
      $region24: #{tpu_custom_call.1} parent=11 // pred_fallthru
        _
    $region12: #{tpu_custom_call.1} parent=5 // pred_fallthru
      _
    %p239 = scmp.lt.s32.totalorder %s12, 4
    // Predicated region
    $region25: #{tpu_custom_call.1} parent=5 // pred_check
      %p240 = pneg %p239
    $region26: #{tpu_custom_call.1} parent=5 // pred_check_branch
      %242 = sbr.rel (%p240) target = $region28
    $region27: #{tpu_custom_call.1} parent=5 // pred_region
      // Predicated region
      $region29: #{tpu_custom_call.1} parent=27 // pred_check
        %p243 = pneg %p46
      $region30: #{tpu_custom_call.1} parent=27 // pred_check_branch
        %245 = sbr.rel (%p243) target = $region32
      $region31: #{tpu_custom_call.1} parent=27 // pred_region
        %s246 = smul.u32 16, %s20
        %p247 = scmp.lt.s32.totalorder %s19, 1
        %s248 = scalar_select %p247, %s19, 1
        %p249 = scmp.lt.s32.totalorder %s246, 31
        %s250 = scalar_select %p249, %s246, 31
        %s251 = smul.addr %s248, 32
        %s252 = sadd.s32 %s250, %s251
        %s253 = smul.addr %s252, 4
        %s254 = scalar_lea.vmem %s0, %s253
        %s255 = smul.u32 16, %s20
      $region32: #{tpu_custom_call.1} parent=27 // pred_fallthru
        _
      // Predicated region
      $region33: #{tpu_custom_call.1} parent=27 // pred_check
        %p256 = pneg %p82
      $region34: #{tpu_custom_call.1} parent=27 // pred_check_branch
        %258 = sbr.rel (%p256) target = $region36
      $region35: #{tpu_custom_call.1} parent=27 // pred_region
        %s259 = smul.u32 %s20, 8
        %s260 = ssub.s32 %s259, 1
        %p261 = scmp.gt.s32.totalorder %s260, 0
        %s262 = scalar_select %p261, %s260, 0
        %s263 = smul.u32 2, %s262
        %p264 = scmp.lt.s32.totalorder %s19, 1
        %s265 = scalar_select %p264, %s19, 1
        %p266 = scmp.lt.s32.totalorder %s263, 31
        %s267 = scalar_select %p266, %s263, 31
        %s268 = smul.addr %s265, 32
        %s269 = sadd.s32 %s267, %s268
        %s270 = smul.addr %s269, 4
        %s271 = scalar_lea.vmem %s1, %s270
        %s272 = smul.u32 %s20, 8
        %s273 = ssub.s32 %s272, 1
        %p274 = scmp.gt.s32.totalorder %s273, 0
        %s275 = scalar_select %p274, %s273, 0
        %s276 = smul.u32 2, %s275
      $region36: #{tpu_custom_call.1} parent=27 // pred_fallthru
        _
      // Predicated region
      $region37: #{tpu_custom_call.1} parent=27 // pred_check
        %p277 = pneg %p118
      $region38: #{tpu_custom_call.1} parent=27 // pred_check_branch
        %279 = sbr.rel (%p277) target = $region40
      $region39: #{tpu_custom_call.1} parent=27 // pred_region
        %s280 = sadd.s32 %s20, 1
        %s281 = smul.u32 %s280, 8
        %p282 = scmp.lt.s32.totalorder %s281, 15
        %s283 = scalar_select %p282, %s281, 15
        %s284 = smul.u32 2, %s283
        %p285 = scmp.lt.s32.totalorder %s19, 1
        %s286 = scalar_select %p285, %s19, 1
        %p287 = scmp.lt.s32.totalorder %s284, 31
        %s288 = scalar_select %p287, %s284, 31
        %s289 = smul.addr %s286, 32
        %s290 = sadd.s32 %s288, %s289
        %s291 = smul.addr %s290, 4
        %s292 = scalar_lea.vmem %s2, %s291
        %s293 = sadd.s32 %s20, 1
        %s294 = smul.u32 %s293, 8
        %p295 = scmp.lt.s32.totalorder %s294, 15
        %s296 = scalar_select %p295, %s294, 15
        %s297 = smul.u32 2, %s296
      $region40: #{tpu_custom_call.1} parent=27 // pred_fallthru
        _
    $region28: #{tpu_custom_call.1} parent=5 // pred_fallthru
      _
    %p298 = scmp.le.s32.totalorder 1, %s12
    %p299 = scmp.lt.s32.totalorder %s12, 5
    %p300 = pnand %p298, %p299
    %p301 = pneg %p300
    // Predicated region
    $region41: #{tpu_custom_call.1} parent=5 // pred_check
      _
    $region42: #{tpu_custom_call.1} parent=5 // pred_check_branch
      %303 = sbr.rel (%p300) target = $region44
    $region43: #{tpu_custom_call.1} parent=5 // pred_region
      %s304 = ssub.s32 %s12, 1
      %s305 = smul.u32 16, %s22
      %p306 = scmp.lt.s32.totalorder %s21, 1
      %s307 = scalar_select %p306, %s21, 1
      %p308 = scmp.lt.s32.totalorder %s305, 31
      %s309 = scalar_select %p308, %s305, 31
      %s310 = smul.addr %s307, 32
      %s311 = sadd.s32 %s309, %s310
      %s312 = smul.addr %s311, 4
      %s313 = scalar_lea.vmem %s0, %s312
      %p314 = pneg %p52
      %p315 = pneg %p49
      %s316 = smul.u32 %s22, 8
      %s317 = ssub.s32 %s316, 1
      %p318 = scmp.gt.s32.totalorder %s317, 0
      %s319 = scalar_select %p318, %s317, 0
      %s320 = smul.u32 2, %s319
      %p321 = scmp.lt.s32.totalorder %s21, 1
      %s322 = scalar_select %p321, %s21, 1
      %p323 = scmp.lt.s32.totalorder %s320, 31
      %s324 = scalar_select %p323, %s320, 31
      %s325 = smul.addr %s322, 32
      %s326 = sadd.s32 %s324, %s325
      %s327 = smul.addr %s326, 4
      %s328 = scalar_lea.vmem %s1, %s327
      %p329 = pneg %p88
      %p330 = pneg %p85
      %s331 = sadd.s32 %s22, 1
      %s332 = smul.u32 %s331, 8
      %p333 = scmp.lt.s32.totalorder %s332, 15
      %s334 = scalar_select %p333, %s332, 15
      %s335 = smul.u32 2, %s334
      %p336 = scmp.lt.s32.totalorder %s21, 1
      %s337 = scalar_select %p336, %s21, 1
      %p338 = scmp.lt.s32.totalorder %s335, 31
      %s339 = scalar_select %p338, %s335, 31
      %s340 = smul.addr %s337, 32
      %s341 = sadd.s32 %s339, %s340
      %s342 = smul.addr %s341, 4
      %s343 = scalar_lea.vmem %s2, %s342
      %p344 = pneg %p124
      %p345 = pneg %p121
      %p346 = pneg %p145
      %p347 = pneg %p142
      %p348 = pneg %p166
      %p349 = pneg %p163
      %p350 = pneg %p187
      %p351 = pneg %p184
      %p352 = pneg %p215
      %p353 = pneg %p212
      %s354 = smul.u32 16, %s22
      %p355 = scmp.lt.s32.totalorder %s21, 1
      %s356 = scalar_select %p355, %s21, 1
      %p357 = scmp.lt.s32.totalorder %s354, 31
      %s358 = scalar_select %p357, %s354, 31
      %s359 = smul.addr %s356, 32
      %s360 = sadd.s32 %s358, %s359
      %s361 = smul.addr %s360, 8
      %s362 = scalar_lea.vmem %s6, %s361
      %s363 = smul.u32 16, %s22
      %p364 = scmp.lt.s32.totalorder %s21, 1
      %s365 = scalar_select %p364, %s21, 1
      %p366 = scmp.lt.s32.totalorder %s363, 31
      %s367 = scalar_select %p366, %s363, 31
      %s368 = smul.addr %s365, 32
      %s369 = sadd.s32 %s367, %s368
      %s370 = smul.addr %s369, 4
      %s371 = scalar_lea.vmem %s0, %s370
      %s372 = smul.u32 16, %s22
      %s373 = smul.u32 %s22, 8
      %s374 = ssub.s32 %s373, 1
      %p375 = scmp.gt.s32.totalorder %s374, 0
      %s376 = scalar_select %p375, %s374, 0
      %s377 = smul.u32 2, %s376
      %p378 = scmp.lt.s32.totalorder %s21, 1
      %s379 = scalar_select %p378, %s21, 1
      %p380 = scmp.lt.s32.totalorder %s377, 31
      %s381 = scalar_select %p380, %s377, 31
      %s382 = smul.addr %s379, 32
      %s383 = sadd.s32 %s381, %s382
      %s384 = smul.addr %s383, 4
      %s385 = scalar_lea.vmem %s1, %s384
      %s386 = smul.u32 %s22, 8
      %s387 = ssub.s32 %s386, 1
      %p388 = scmp.gt.s32.totalorder %s387, 0
      %s389 = scalar_select %p388, %s387, 0
      %s390 = smul.u32 2, %s389
      %s391 = sadd.s32 %s22, 1
      %s392 = smul.u32 %s391, 8
      %p393 = scmp.lt.s32.totalorder %s392, 15
      %s394 = scalar_select %p393, %s392, 15
      %s395 = smul.u32 2, %s394
      %p396 = scmp.lt.s32.totalorder %s21, 1
      %s397 = scalar_select %p396, %s21, 1
      %p398 = scmp.lt.s32.totalorder %s395, 31
      %s399 = scalar_select %p398, %s395, 31
      %s400 = smul.addr %s397, 32
      %s401 = sadd.s32 %s399, %s400
      %s402 = smul.addr %s401, 4
      %s403 = scalar_lea.vmem %s2, %s402
      %s404 = sadd.s32 %s22, 1
      %s405 = smul.u32 %s404, 8
      %p406 = scmp.lt.s32.totalorder %s405, 15
      %s407 = scalar_select %p406, %s405, 15
      %s408 = smul.u32 2, %s407
      %s409 = smul.u32 16, %s22
      %p410 = scmp.lt.s32.totalorder %s21, 1
      %s411 = scalar_select %p410, %s21, 1
      %p412 = scmp.lt.s32.totalorder %s409, 31
      %s413 = scalar_select %p412, %s409, 31
      %s414 = smul.addr %s411, 32
      %s415 = sadd.s32 %s413, %s414
      %s416 = smul.addr %s415, 8
      %s417 = scalar_lea.vmem %s6, %s416
      %s418 = smul.u32 16, %s22
      %v420 = vld [vmem:[%s3] sm:$0x3]
      %v421 = vld [vmem:[%s371] sm:$0xf]
      %v422 = vld [vmem:[%s371 + $0x4] sm:$0xf]
      %v423 = vld [vmem:[%s371 + $0x8] sm:$0xf]
      %v424 = vld [vmem:[%s371 + $0xc] sm:$0xf]
      %v425 = vld [vmem:[%s371 + $0x10] sm:$0xf]
      %v426 = vld [vmem:[%s371 + $0x14] sm:$0xf]
      %v427 = vld [vmem:[%s371 + $0x18] sm:$0xf]
      %v428 = vld [vmem:[%s371 + $0x1c] sm:$0xf]
      %v429 = vld [vmem:[%s371 + $0x20] sm:$0xf]
      %v430 = vld [vmem:[%s371 + $0x24] sm:$0xf]
      %v431 = vld [vmem:[%s371 + $0x28] sm:$0xf]
      %v432 = vld [vmem:[%s371 + $0x2c] sm:$0xf]
      %v433 = vld [vmem:[%s371 + $0x30] sm:$0xf]
      %v434 = vld [vmem:[%s371 + $0x34] sm:$0xf]
      %v435 = vld [vmem:[%s371 + $0x38] sm:$0xf]
      %v436 = vld [vmem:[%s371 + $0x3c] sm:$0xf]
      %v453 = vunpack.c.l.b16 %v421
      %v454 = vunpack.c.l.b16 %v422
      %v455 = vunpack.c.l.b16 %v423
      %v456 = vunpack.c.l.b16 %v424
      %v457 = vunpack.c.l.b16 %v425
      %v458 = vunpack.c.l.b16 %v426
      %v459 = vunpack.c.l.b16 %v427
      %v460 = vunpack.c.l.b16 %v428
      %v461 = vunpack.c.l.b16 %v429
      %v462 = vunpack.c.l.b16 %v430
      %v463 = vunpack.c.l.b16 %v431
      %v464 = vunpack.c.l.b16 %v432
      %v465 = vunpack.c.l.b16 %v433
      %v466 = vunpack.c.l.b16 %v434
      %v467 = vunpack.c.l.b16 %v435
      %v468 = vunpack.c.l.b16 %v436
      %v469 = vpack.c.b16 %v454, %v453
      %v470 = vpack.c.b16 %v456, %v455
      %v471 = vpack.c.b16 %v458, %v457
      %v472 = vpack.c.b16 %v460, %v459
      %v473 = vpack.c.b16 %v462, %v461
      %v474 = vpack.c.b16 %v464, %v463
      %v475 = vpack.c.b16 %v466, %v465
      %v476 = vpack.c.b16 %v468, %v467
      %vm477 = vcmask 31744
      %v479 = vsel %vm477, %v469, 0
      %v482 = vsel %vm477, %v470, 0
      %v485 = vsel %vm477, %v471, 0
      %v488 = vsel %vm477, %v472, 0
      %v491 = vsel %vm477, %v473, 0
      %v494 = vsel %vm477, %v474, 0
      %v497 = vsel %vm477, %v475, 0
      %v500 = vsel %vm477, %v476, 0
      %vm502 = vcmask 1041408
      %v504 = vsel %vm502, %v420, 0
      %506 = vmatpush.bf16.msra.mxu0 0
      %507 = vmatpush.bf16.msra.mxu0 0
      %508 = vmatpush.bf16.msra.mxu0 0
      %509 = vmatpush.bf16.msra.mxu0 0
      %510 = vmatpush.bf16.msra.mxu0 0
      %511 = vmatpush.bf16.msra.mxu0 0
      %512 = vmatpush.bf16.msra.mxu0 0
      %513 = vmatpush.bf16.msra.mxu0 %v504
      %514 = vmatmul.bf16.gmra.mxu0 %v479
      %v515 = vpop.f32.mrf.mxu0
      %v516 = vadd.f32 0.0, %v515
      %v517 = vpop.f32.mrf.mxu0
      %v518 = vadd.f32 0.0, %v517
      %519 = vmatmul.bf16.gmra.mxu0 %v482
      %v520 = vpop.f32.mrf.mxu0
      %v521 = vadd.f32 0.0, %v520
      %v522 = vpop.f32.mrf.mxu0
      %v523 = vadd.f32 0.0, %v522
      %524 = vmatmul.bf16.gmra.mxu0 %v485
      %v525 = vpop.f32.mrf.mxu0
      %v526 = vadd.f32 0.0, %v525
      %v527 = vpop.f32.mrf.mxu0
      %v528 = vadd.f32 0.0, %v527
      %529 = vmatmul.bf16.gmra.mxu0 %v488
      %v530 = vpop.f32.mrf.mxu0
      %v531 = vadd.f32 0.0, %v530
      %v532 = vpop.f32.mrf.mxu0
      %v533 = vadd.f32 0.0, %v532
      %534 = vmatmul.bf16.gmra.mxu0 %v491
      %v535 = vpop.f32.mrf.mxu0
      %v536 = vadd.f32 0.0, %v535
      %v537 = vpop.f32.mrf.mxu0
      %v538 = vadd.f32 0.0, %v537
      %539 = vmatmul.bf16.gmra.mxu0 %v494
      %v540 = vpop.f32.mrf.mxu0
      %v541 = vadd.f32 0.0, %v540
      %v542 = vpop.f32.mrf.mxu0
      %v543 = vadd.f32 0.0, %v542
      %544 = vmatmul.bf16.gmra.mxu0 %v497
      %v545 = vpop.f32.mrf.mxu0
      %v546 = vadd.f32 0.0, %v545
      %v547 = vpop.f32.mrf.mxu0
      %v548 = vadd.f32 0.0, %v547
      %549 = vmatmul.bf16.gmra.mxu0 %v500
      %v550 = vpop.f32.mrf.mxu0
      %v551 = vadd.f32 0.0, %v550
      %v552 = vpop.f32.mrf.mxu0
      %v553 = vadd.f32 0.0, %v552
      %554 = vdwg.mxu0
      %v555 = vmul.f32 %v516, 0.5
      %v556 = vmul.f32 %v518, 0.5
      %v557 = vmul.f32 %v521, 0.5
      %v558 = vmul.f32 %v523, 0.5
      %v559 = vmul.f32 %v526, 0.5
      %v560 = vmul.f32 %v528, 0.5
      %v561 = vmul.f32 %v531, 0.5
      %v562 = vmul.f32 %v533, 0.5
      %v563 = vmul.f32 %v536, 0.5
      %v564 = vmul.f32 %v538, 0.5
      %v565 = vmul.f32 %v541, 0.5
      %v566 = vmul.f32 %v543, 0.5
      %v567 = vmul.f32 %v546, 0.5
      %v568 = vmul.f32 %v548, 0.5
      %v569 = vmul.f32 %v551, 0.5
      %v570 = vmul.f32 %v553, 0.5
      %v571 = vmul.f32 %v516, 0.70710677
      %v572 = vmul.f32 %v518, 0.70710677
      %v573 = vmul.f32 %v521, 0.70710677
      %v574 = vmul.f32 %v523, 0.70710677
      %v575 = vmul.f32 %v526, 0.70710677
      %v576 = vmul.f32 %v528, 0.70710677
      %v577 = vmul.f32 %v531, 0.70710677
      %v578 = vmul.f32 %v533, 0.70710677
      %v579 = vmul.f32 %v536, 0.70710677
      %v580 = vmul.f32 %v538, 0.70710677
      %v581 = vmul.f32 %v541, 0.70710677
      %v582 = vmul.f32 %v543, 0.70710677
      %v583 = vmul.f32 %v546, 0.70710677
      %v584 = vmul.f32 %v548, 0.70710677
      %v585 = vmul.f32 %v551, 0.70710677
      %v586 = vmul.f32 %v553, 0.70710677
      %v587 = vmul.f32 %v571, %v571
      %v588 = vmin.f32 16.0, %v587
      %v589 = vmul.f32 %v588, 2.1237322e-06
      %v590 = vadd.f32 %v589, 0.00028619796
      %v591 = vmul.f32 %v588, %v590
      %v592 = vadd.f32 %v591, 0.0036580483
      %v593 = vmul.f32 %v588, %v592
      %v594 = vadd.f32 %v593, 0.05243302
      %v595 = vmul.f32 %v588, %v594
      %v596 = vadd.f32 %v595, 0.18741608
      %v597 = vmul.f32 %v588, %v596
      %v598 = vadd.f32 %v597, 1.1283791
      %v599 = vmul.f32 %v571, %v598
      %v600 = vmul.f32 %v588, 3.8918573e-05
      %v601 = vadd.f32 %v600, 0.001143296
      %v602 = vmul.f32 %v588, %v601
      %v603 = vadd.f32 %v602, 0.014752088
      %v604 = vmul.f32 %v588, %v603
      %v605 = vadd.f32 %v604, 0.112945676
      %v606 = vmul.f32 %v588, %v605
      %v607 = vadd.f32 %v606, 0.4994258
      %v608 = vmul.f32 %v588, %v607
      %v609 = vadd.f32 %v608, 1.0
      %v610 = vrcp.pop %v609
      %v611 = vmul.f32 %v609, %v610
      %v612 = vsub.f32 1.0, %v611
      %v613 = vmul.f32 %v610, %v612
      %v614 = vadd.f32 %v610, %v613
      %vm615 = vweird.f32 %v609
      %vm616 = vweird.f32 %v610
      %vm617 = vmor %vm615, %vm616
      %v618 = vsel %vm617, %v610, %v614
      %v619 = vand.u32 2147483647, %v609
      %vm620 = vcmp.eq.f32.partialorder %v619, 8.507059e+37
      %v621 = vand.u32 %v609, 2147483648
      %v622 = vor.u32 1.1754944e-38, %v621
      %v623 = vsel %vm620, %v622, %v618
      %v624 = vmul.f32 %v599, %v623
      %v625 = vmin.f32 %v624, 1.0
      %v626 = vmax.f32 %v625, -1.0
      %v627 = vmul.f32 %v572, %v572
      %v628 = vmin.f32 16.0, %v627
      %v629 = vmul.f32 %v628, 2.1237322e-06
      %v630 = vadd.f32 %v629, 0.00028619796
      %v631 = vmul.f32 %v628, %v630
      %v632 = vadd.f32 %v631, 0.0036580483
      %v633 = vmul.f32 %v628, %v632
      %v634 = vadd.f32 %v633, 0.05243302
      %v635 = vmul.f32 %v628, %v634
      %v636 = vadd.f32 %v635, 0.18741608
      %v637 = vmul.f32 %v628, %v636
      %v638 = vadd.f32 %v637, 1.1283791
      %v639 = vmul.f32 %v572, %v638
      %v640 = vmul.f32 %v628, 3.8918573e-05
      %v641 = vadd.f32 %v640, 0.001143296
      %v642 = vmul.f32 %v628, %v641
      %v643 = vadd.f32 %v642, 0.014752088
      %v644 = vmul.f32 %v628, %v643
      %v645 = vadd.f32 %v644, 0.112945676
      %v646 = vmul.f32 %v628, %v645
      %v647 = vadd.f32 %v646, 0.4994258
      %v648 = vmul.f32 %v628, %v647
      %v649 = vadd.f32 %v648, 1.0
      %v650 = vrcp.pop %v649
      %v651 = vmul.f32 %v649, %v650
      %v652 = vsub.f32 1.0, %v651
      %v653 = vmul.f32 %v650, %v652
      %v654 = vadd.f32 %v650, %v653
      %vm655 = vweird.f32 %v649
      %vm656 = vweird.f32 %v650
      %vm657 = vmor %vm655, %vm656
      %v658 = vsel %vm657, %v650, %v654
      %v659 = vand.u32 2147483647, %v649
      %vm660 = vcmp.eq.f32.partialorder %v659, 8.507059e+37
      %v661 = vand.u32 %v649, 2147483648
      %v662 = vor.u32 1.1754944e-38, %v661
      %v663 = vsel %vm660, %v662, %v658
      %v664 = vmul.f32 %v639, %v663
      %v665 = vmin.f32 %v664, 1.0
      %v666 = vmax.f32 %v665, -1.0
      %v667 = vmul.f32 %v573, %v573
      %v668 = vmin.f32 16.0, %v667
      %v669 = vmul.f32 %v668, 2.1237322e-06
      %v670 = vadd.f32 %v669, 0.00028619796
      %v671 = vmul.f32 %v668, %v670
      %v672 = vadd.f32 %v671, 0.0036580483
      %v673 = vmul.f32 %v668, %v672
      %v674 = vadd.f32 %v673, 0.05243302
      %v675 = vmul.f32 %v668, %v674
      %v676 = vadd.f32 %v675, 0.18741608
      %v677 = vmul.f32 %v668, %v676
      %v678 = vadd.f32 %v677, 1.1283791
      %v679 = vmul.f32 %v573, %v678
      %v680 = vmul.f32 %v668, 3.8918573e-05
      %v681 = vadd.f32 %v680, 0.001143296
      %v682 = vmul.f32 %v668, %v681
      %v683 = vadd.f32 %v682, 0.014752088
      %v684 = vmul.f32 %v668, %v683
      %v685 = vadd.f32 %v684, 0.112945676
      %v686 = vmul.f32 %v668, %v685
      %v687 = vadd.f32 %v686, 0.4994258
      %v688 = vmul.f32 %v668, %v687
      %v689 = vadd.f32 %v688, 1.0
      %v690 = vrcp.pop %v689
      %v691 = vmul.f32 %v689, %v690
      %v692 = vsub.f32 1.0, %v691
      %v693 = vmul.f32 %v690, %v692
      %v694 = vadd.f32 %v690, %v693
      %vm695 = vweird.f32 %v689
      %vm696 = vweird.f32 %v690
      %vm697 = vmor %vm695, %vm696
      %v698 = vsel %vm697, %v690, %v694
      %v699 = vand.u32 2147483647, %v689
      %vm700 = vcmp.eq.f32.partialorder %v699, 8.507059e+37
      %v701 = vand.u32 %v689, 2147483648
      %v702 = vor.u32 1.1754944e-38, %v701
      %v703 = vsel %vm700, %v702, %v698
      %v704 = vmul.f32 %v679, %v703
      %v705 = vmin.f32 %v704, 1.0
      %v706 = vmax.f32 %v705, -1.0
      %v707 = vmul.f32 %v574, %v574
      %v708 = vmin.f32 16.0, %v707
      %v709 = vmul.f32 %v708, 2.1237322e-06
      %v710 = vadd.f32 %v709, 0.00028619796
      %v711 = vmul.f32 %v708, %v710
      %v712 = vadd.f32 %v711, 0.0036580483
      %v713 = vmul.f32 %v708, %v712
      %v714 = vadd.f32 %v713, 0.05243302
      %v715 = vmul.f32 %v708, %v714
      %v716 = vadd.f32 %v715, 0.18741608
      %v717 = vmul.f32 %v708, %v716
      %v718 = vadd.f32 %v717, 1.1283791
      %v719 = vmul.f32 %v574, %v718
      %v720 = vmul.f32 %v708, 3.8918573e-05
      %v721 = vadd.f32 %v720, 0.001143296
      %v722 = vmul.f32 %v708, %v721
      %v723 = vadd.f32 %v722, 0.014752088
      %v724 = vmul.f32 %v708, %v723
      %v725 = vadd.f32 %v724, 0.112945676
      %v726 = vmul.f32 %v708, %v725
      %v727 = vadd.f32 %v726, 0.4994258
      %v728 = vmul.f32 %v708, %v727
      %v729 = vadd.f32 %v728, 1.0
      %v730 = vrcp.pop %v729
      %v731 = vmul.f32 %v729, %v730
      %v732 = vsub.f32 1.0, %v731
      %v733 = vmul.f32 %v730, %v732
      %v734 = vadd.f32 %v730, %v733
      %vm735 = vweird.f32 %v729
      %vm736 = vweird.f32 %v730
      %vm737 = vmor %vm735, %vm736
      %v738 = vsel %vm737, %v730, %v734
      %v739 = vand.u32 2147483647, %v729
      %vm740 = vcmp.eq.f32.partialorder %v739, 8.507059e+37
      %v741 = vand.u32 %v729, 2147483648
      %v742 = vor.u32 1.1754944e-38, %v741
      %v743 = vsel %vm740, %v742, %v738
      %v744 = vmul.f32 %v719, %v743
      %v745 = vmin.f32 %v744, 1.0
      %v746 = vmax.f32 %v745, -1.0
      %v747 = vmul.f32 %v575, %v575
      %v748 = vmin.f32 16.0, %v747
      %v749 = vmul.f32 %v748, 2.1237322e-06
      %v750 = vadd.f32 %v749, 0.00028619796
      %v751 = vmul.f32 %v748, %v750
      %v752 = vadd.f32 %v751, 0.0036580483
      %v753 = vmul.f32 %v748, %v752
      %v754 = vadd.f32 %v753, 0.05243302
      %v755 = vmul.f32 %v748, %v754
      %v756 = vadd.f32 %v755, 0.18741608
      %v757 = vmul.f32 %v748, %v756
      %v758 = vadd.f32 %v757, 1.1283791
      %v759 = vmul.f32 %v575, %v758
      %v760 = vmul.f32 %v748, 3.8918573e-05
      %v761 = vadd.f32 %v760, 0.001143296
      %v762 = vmul.f32 %v748, %v761
      %v763 = vadd.f32 %v762, 0.014752088
      %v764 = vmul.f32 %v748, %v763
      %v765 = vadd.f32 %v764, 0.112945676
      %v766 = vmul.f32 %v748, %v765
      %v767 = vadd.f32 %v766, 0.4994258
      %v768 = vmul.f32 %v748, %v767
      %v769 = vadd.f32 %v768, 1.0
      %v770 = vrcp.pop %v769
      %v771 = vmul.f32 %v769, %v770
      %v772 = vsub.f32 1.0, %v771
      %v773 = vmul.f32 %v770, %v772
      %v774 = vadd.f32 %v770, %v773
      %vm775 = vweird.f32 %v769
      %vm776 = vweird.f32 %v770
      %vm777 = vmor %vm775, %vm776
      %v778 = vsel %vm777, %v770, %v774
      %v779 = vand.u32 2147483647, %v769
      %vm780 = vcmp.eq.f32.partialorder %v779, 8.507059e+37
      %v781 = vand.u32 %v769, 2147483648
      %v782 = vor.u32 1.1754944e-38, %v781
      %v783 = vsel %vm780, %v782, %v778
      %v784 = vmul.f32 %v759, %v783
      %v785 = vmin.f32 %v784, 1.0
      %v786 = vmax.f32 %v785, -1.0
      %v787 = vmul.f32 %v576, %v576
      %v788 = vmin.f32 16.0, %v787
      %v789 = vmul.f32 %v788, 2.1237322e-06
      %v790 = vadd.f32 %v789, 0.00028619796
      %v791 = vmul.f32 %v788, %v790
      %v792 = vadd.f32 %v791, 0.0036580483
      %v793 = vmul.f32 %v788, %v792
      %v794 = vadd.f32 %v793, 0.05243302
      %v795 = vmul.f32 %v788, %v794
      %v796 = vadd.f32 %v795, 0.18741608
      %v797 = vmul.f32 %v788, %v796
      %v798 = vadd.f32 %v797, 1.1283791
      %v799 = vmul.f32 %v576, %v798
      %v800 = vmul.f32 %v788, 3.8918573e-05
      %v801 = vadd.f32 %v800, 0.001143296
      %v802 = vmul.f32 %v788, %v801
      %v803 = vadd.f32 %v802, 0.014752088
      %v804 = vmul.f32 %v788, %v803
      %v805 = vadd.f32 %v804, 0.112945676
      %v806 = vmul.f32 %v788, %v805
      %v807 = vadd.f32 %v806, 0.4994258
      %v808 = vmul.f32 %v788, %v807
      %v809 = vadd.f32 %v808, 1.0
      %v810 = vrcp.pop %v809
      %v811 = vmul.f32 %v809, %v810
      %v812 = vsub.f32 1.0, %v811
      %v813 = vmul.f32 %v810, %v812
      %v814 = vadd.f32 %v810, %v813
      %vm815 = vweird.f32 %v809
      %vm816 = vweird.f32 %v810
      %vm817 = vmor %vm815, %vm816
      %v818 = vsel %vm817, %v810, %v814
      %v819 = vand.u32 2147483647, %v809
      %vm820 = vcmp.eq.f32.partialorder %v819, 8.507059e+37
      %v821 = vand.u32 %v809, 2147483648
      %v822 = vor.u32 1.1754944e-38, %v821
      %v823 = vsel %vm820, %v822, %v818
      %v824 = vmul.f32 %v799, %v823
      %v825 = vmin.f32 %v824, 1.0
      %v826 = vmax.f32 %v825, -1.0
      %v827 = vmul.f32 %v577, %v577
      %v828 = vmin.f32 16.0, %v827
      %v829 = vmul.f32 %v828, 2.1237322e-06
      %v830 = vadd.f32 %v829, 0.00028619796
      %v831 = vmul.f32 %v828, %v830
      %v832 = vadd.f32 %v831, 0.0036580483
      %v833 = vmul.f32 %v828, %v832
      %v834 = vadd.f32 %v833, 0.05243302
      %v835 = vmul.f32 %v828, %v834
      %v836 = vadd.f32 %v835, 0.18741608
      %v837 = vmul.f32 %v828, %v836
      %v838 = vadd.f32 %v837, 1.1283791
      %v839 = vmul.f32 %v577, %v838
      %v840 = vmul.f32 %v828, 3.8918573e-05
      %v841 = vadd.f32 %v840, 0.001143296
      %v842 = vmul.f32 %v828, %v841
      %v843 = vadd.f32 %v842, 0.014752088
      %v844 = vmul.f32 %v828, %v843
      %v845 = vadd.f32 %v844, 0.112945676
      %v846 = vmul.f32 %v828, %v845
      %v847 = vadd.f32 %v846, 0.4994258
      %v848 = vmul.f32 %v828, %v847
      %v849 = vadd.f32 %v848, 1.0
      %v850 = vrcp.pop %v849
      %v851 = vmul.f32 %v849, %v850
      %v852 = vsub.f32 1.0, %v851
      %v853 = vmul.f32 %v850, %v852
      %v854 = vadd.f32 %v850, %v853
      %vm855 = vweird.f32 %v849
      %vm856 = vweird.f32 %v850
      %vm857 = vmor %vm855, %vm856
      %v858 = vsel %vm857, %v850, %v854
      %v859 = vand.u32 2147483647, %v849
      %vm860 = vcmp.eq.f32.partialorder %v859, 8.507059e+37
      %v861 = vand.u32 %v849, 2147483648
      %v862 = vor.u32 1.1754944e-38, %v861
      %v863 = vsel %vm860, %v862, %v858
      %v864 = vmul.f32 %v839, %v863
      %v865 = vmin.f32 %v864, 1.0
      %v866 = vmax.f32 %v865, -1.0
      %v867 = vmul.f32 %v578, %v578
      %v868 = vmin.f32 16.0, %v867
      %v869 = vmul.f32 %v868, 2.1237322e-06
      %v870 = vadd.f32 %v869, 0.00028619796
      %v871 = vmul.f32 %v868, %v870
      %v872 = vadd.f32 %v871, 0.0036580483
      %v873 = vmul.f32 %v868, %v872
      %v874 = vadd.f32 %v873, 0.05243302
      %v875 = vmul.f32 %v868, %v874
      %v876 = vadd.f32 %v875, 0.18741608
      %v877 = vmul.f32 %v868, %v876
      %v878 = vadd.f32 %v877, 1.1283791
      %v879 = vmul.f32 %v578, %v878
      %v880 = vmul.f32 %v868, 3.8918573e-05
      %v881 = vadd.f32 %v880, 0.001143296
      %v882 = vmul.f32 %v868, %v881
      %v883 = vadd.f32 %v882, 0.014752088
      %v884 = vmul.f32 %v868, %v883
      %v885 = vadd.f32 %v884, 0.112945676
      %v886 = vmul.f32 %v868, %v885
      %v887 = vadd.f32 %v886, 0.4994258
      %v888 = vmul.f32 %v868, %v887
      %v889 = vadd.f32 %v888, 1.0
      %v890 = vrcp.pop %v889
      %v891 = vmul.f32 %v889, %v890
      %v892 = vsub.f32 1.0, %v891
      %v893 = vmul.f32 %v890, %v892
      %v894 = vadd.f32 %v890, %v893
      %vm895 = vweird.f32 %v889
      %vm896 = vweird.f32 %v890
      %vm897 = vmor %vm895, %vm896
      %v898 = vsel %vm897, %v890, %v894
      %v899 = vand.u32 2147483647, %v889
      %vm900 = vcmp.eq.f32.partialorder %v899, 8.507059e+37
      %v901 = vand.u32 %v889, 2147483648
      %v902 = vor.u32 1.1754944e-38, %v901
      %v903 = vsel %vm900, %v902, %v898
      %v904 = vmul.f32 %v879, %v903
      %v905 = vmin.f32 %v904, 1.0
      %v906 = vmax.f32 %v905, -1.0
      %v907 = vmul.f32 %v579, %v579
      %v908 = vmin.f32 16.0, %v907
      %v909 = vmul.f32 %v908, 2.1237322e-06
      %v910 = vadd.f32 %v909, 0.00028619796
      %v911 = vmul.f32 %v908, %v910
      %v912 = vadd.f32 %v911, 0.0036580483
      %v913 = vmul.f32 %v908, %v912
      %v914 = vadd.f32 %v913, 0.05243302
      %v915 = vmul.f32 %v908, %v914
      %v916 = vadd.f32 %v915, 0.18741608
      %v917 = vmul.f32 %v908, %v916
      %v918 = vadd.f32 %v917, 1.1283791
      %v919 = vmul.f32 %v579, %v918
      %v920 = vmul.f32 %v908, 3.8918573e-05
      %v921 = vadd.f32 %v920, 0.001143296
      %v922 = vmul.f32 %v908, %v921
      %v923 = vadd.f32 %v922, 0.014752088
      %v924 = vmul.f32 %v908, %v923
      %v925 = vadd.f32 %v924, 0.112945676
      %v926 = vmul.f32 %v908, %v925
      %v927 = vadd.f32 %v926, 0.4994258
      %v928 = vmul.f32 %v908, %v927
      %v929 = vadd.f32 %v928, 1.0
      %v930 = vrcp.pop %v929
      %v931 = vmul.f32 %v929, %v930
      %v932 = vsub.f32 1.0, %v931
      %v933 = vmul.f32 %v930, %v932
      %v934 = vadd.f32 %v930, %v933
      %vm935 = vweird.f32 %v929
      %vm936 = vweird.f32 %v930
      %vm937 = vmor %vm935, %vm936
      %v938 = vsel %vm937, %v930, %v934
      %v939 = vand.u32 2147483647, %v929
      %vm940 = vcmp.eq.f32.partialorder %v939, 8.507059e+37
      %v941 = vand.u32 %v929, 2147483648
      %v942 = vor.u32 1.1754944e-38, %v941
      %v943 = vsel %vm940, %v942, %v938
      %v944 = vmul.f32 %v919, %v943
      %v945 = vmin.f32 %v944, 1.0
      %v946 = vmax.f32 %v945, -1.0
      %v947 = vmul.f32 %v580, %v580
      %v948 = vmin.f32 16.0, %v947
      %v949 = vmul.f32 %v948, 2.1237322e-06
      %v950 = vadd.f32 %v949, 0.00028619796
      %v951 = vmul.f32 %v948, %v950
      %v952 = vadd.f32 %v951, 0.0036580483
      %v953 = vmul.f32 %v948, %v952
      %v954 = vadd.f32 %v953, 0.05243302
      %v955 = vmul.f32 %v948, %v954
      %v956 = vadd.f32 %v955, 0.18741608
      %v957 = vmul.f32 %v948, %v956
      %v958 = vadd.f32 %v957, 1.1283791
      %v959 = vmul.f32 %v580, %v958
      %v960 = vmul.f32 %v948, 3.8918573e-05
      %v961 = vadd.f32 %v960, 0.001143296
      %v962 = vmul.f32 %v948, %v961
      %v963 = vadd.f32 %v962, 0.014752088
      %v964 = vmul.f32 %v948, %v963
      %v965 = vadd.f32 %v964, 0.112945676
      %v966 = vmul.f32 %v948, %v965
      %v967 = vadd.f32 %v966, 0.4994258
      %v968 = vmul.f32 %v948, %v967
      %v969 = vadd.f32 %v968, 1.0
      %v970 = vrcp.pop %v969
      %v971 = vmul.f32 %v969, %v970
      %v972 = vsub.f32 1.0, %v971
      %v973 = vmul.f32 %v970, %v972
      %v974 = vadd.f32 %v970, %v973
      %vm975 = vweird.f32 %v969
      %vm976 = vweird.f32 %v970
      %vm977 = vmor %vm975, %vm976
      %v978 = vsel %vm977, %v970, %v974
      %v979 = vand.u32 2147483647, %v969
      %vm980 = vcmp.eq.f32.partialorder %v979, 8.507059e+37
      %v981 = vand.u32 %v969, 2147483648
      %v982 = vor.u32 1.1754944e-38, %v981
      %v983 = vsel %vm980, %v982, %v978
      %v984 = vmul.f32 %v959, %v983
      %v985 = vmin.f32 %v984, 1.0
      %v986 = vmax.f32 %v985, -1.0
      %v987 = vmul.f32 %v581, %v581
      %v988 = vmin.f32 16.0, %v987
      %v989 = vmul.f32 %v988, 2.1237322e-06
      %v990 = vadd.f32 %v989, 0.00028619796
      %v991 = vmul.f32 %v988, %v990
      %v992 = vadd.f32 %v991, 0.0036580483
      %v993 = vmul.f32 %v988, %v992
      %v994 = vadd.f32 %v993, 0.05243302
      %v995 = vmul.f32 %v988, %v994
      %v996 = vadd.f32 %v995, 0.18741608
      %v997 = vmul.f32 %v988, %v996
      %v998 = vadd.f32 %v997, 1.1283791
      %v999 = vmul.f32 %v581, %v998
      %v1000 = vmul.f32 %v988, 3.8918573e-05
      %v1001 = vadd.f32 %v1000, 0.001143296
      %v1002 = vmul.f32 %v988, %v1001
      %v1003 = vadd.f32 %v1002, 0.014752088
      %v1004 = vmul.f32 %v988, %v1003
      %v1005 = vadd.f32 %v1004, 0.112945676
      %v1006 = vmul.f32 %v988, %v1005
      %v1007 = vadd.f32 %v1006, 0.4994258
      %v1008 = vmul.f32 %v988, %v1007
      %v1009 = vadd.f32 %v1008, 1.0
      %v1010 = vrcp.pop %v1009
      %v1011 = vmul.f32 %v1009, %v1010
      %v1012 = vsub.f32 1.0, %v1011
      %v1013 = vmul.f32 %v1010, %v1012
      %v1014 = vadd.f32 %v1010, %v1013
      %vm1015 = vweird.f32 %v1009
      %vm1016 = vweird.f32 %v1010
      %vm1017 = vmor %vm1015, %vm1016
      %v1018 = vsel %vm1017, %v1010, %v1014
      %v1019 = vand.u32 2147483647, %v1009
      %vm1020 = vcmp.eq.f32.partialorder %v1019, 8.507059e+37
      %v1021 = vand.u32 %v1009, 2147483648
      %v1022 = vor.u32 1.1754944e-38, %v1021
      %v1023 = vsel %vm1020, %v1022, %v1018
      %v1024 = vmul.f32 %v999, %v1023
      %v1025 = vmin.f32 %v1024, 1.0
      %v1026 = vmax.f32 %v1025, -1.0
      %v1027 = vmul.f32 %v582, %v582
      %v1028 = vmin.f32 16.0, %v1027
      %v1029 = vmul.f32 %v1028, 2.1237322e-06
      %v1030 = vadd.f32 %v1029, 0.00028619796
      %v1031 = vmul.f32 %v1028, %v1030
      %v1032 = vadd.f32 %v1031, 0.0036580483
      %v1033 = vmul.f32 %v1028, %v1032
      %v1034 = vadd.f32 %v1033, 0.05243302
      %v1035 = vmul.f32 %v1028, %v1034
      %v1036 = vadd.f32 %v1035, 0.18741608
      %v1037 = vmul.f32 %v1028, %v1036
      %v1038 = vadd.f32 %v1037, 1.1283791
      %v1039 = vmul.f32 %v582, %v1038
      %v1040 = vmul.f32 %v1028, 3.8918573e-05
      %v1041 = vadd.f32 %v1040, 0.001143296
      %v1042 = vmul.f32 %v1028, %v1041
      %v1043 = vadd.f32 %v1042, 0.014752088
      %v1044 = vmul.f32 %v1028, %v1043
      %v1045 = vadd.f32 %v1044, 0.112945676
      %v1046 = vmul.f32 %v1028, %v1045
      %v1047 = vadd.f32 %v1046, 0.4994258
      %v1048 = vmul.f32 %v1028, %v1047
      %v1049 = vadd.f32 %v1048, 1.0
      %v1050 = vrcp.pop %v1049
      %v1051 = vmul.f32 %v1049, %v1050
      %v1052 = vsub.f32 1.0, %v1051
      %v1053 = vmul.f32 %v1050, %v1052
      %v1054 = vadd.f32 %v1050, %v1053
      %vm1055 = vweird.f32 %v1049
      %vm1056 = vweird.f32 %v1050
      %vm1057 = vmor %vm1055, %vm1056
      %v1058 = vsel %vm1057, %v1050, %v1054
      %v1059 = vand.u32 2147483647, %v1049
      %vm1060 = vcmp.eq.f32.partialorder %v1059, 8.507059e+37
      %v1061 = vand.u32 %v1049, 2147483648
      %v1062 = vor.u32 1.1754944e-38, %v1061
      %v1063 = vsel %vm1060, %v1062, %v1058
      %v1064 = vmul.f32 %v1039, %v1063
      %v1065 = vmin.f32 %v1064, 1.0
      %v1066 = vmax.f32 %v1065, -1.0
      %v1067 = vmul.f32 %v583, %v583
      %v1068 = vmin.f32 16.0, %v1067
      %v1069 = vmul.f32 %v1068, 2.1237322e-06
      %v1070 = vadd.f32 %v1069, 0.00028619796
      %v1071 = vmul.f32 %v1068, %v1070
      %v1072 = vadd.f32 %v1071, 0.0036580483
      %v1073 = vmul.f32 %v1068, %v1072
      %v1074 = vadd.f32 %v1073, 0.05243302
      %v1075 = vmul.f32 %v1068, %v1074
      %v1076 = vadd.f32 %v1075, 0.18741608
      %v1077 = vmul.f32 %v1068, %v1076
      %v1078 = vadd.f32 %v1077, 1.1283791
      %v1079 = vmul.f32 %v583, %v1078
      %v1080 = vmul.f32 %v1068, 3.8918573e-05
      %v1081 = vadd.f32 %v1080, 0.001143296
      %v1082 = vmul.f32 %v1068, %v1081
      %v1083 = vadd.f32 %v1082, 0.014752088
      %v1084 = vmul.f32 %v1068, %v1083
      %v1085 = vadd.f32 %v1084, 0.112945676
      %v1086 = vmul.f32 %v1068, %v1085
      %v1087 = vadd.f32 %v1086, 0.4994258
      %v1088 = vmul.f32 %v1068, %v1087
      %v1089 = vadd.f32 %v1088, 1.0
      %v1090 = vrcp.pop %v1089
      %v1091 = vmul.f32 %v1089, %v1090
      %v1092 = vsub.f32 1.0, %v1091
      %v1093 = vmul.f32 %v1090, %v1092
      %v1094 = vadd.f32 %v1090, %v1093
      %vm1095 = vweird.f32 %v1089
      %vm1096 = vweird.f32 %v1090
      %vm1097 = vmor %vm1095, %vm1096
      %v1098 = vsel %vm1097, %v1090, %v1094
      %v1099 = vand.u32 2147483647, %v1089
      %vm1100 = vcmp.eq.f32.partialorder %v1099, 8.507059e+37
      %v1101 = vand.u32 %v1089, 2147483648
      %v1102 = vor.u32 1.1754944e-38, %v1101
      %v1103 = vsel %vm1100, %v1102, %v1098
      %v1104 = vmul.f32 %v1079, %v1103
      %v1105 = vmin.f32 %v1104, 1.0
      %v1106 = vmax.f32 %v1105, -1.0
      %v1107 = vmul.f32 %v584, %v584
      %v1108 = vmin.f32 16.0, %v1107
      %v1109 = vmul.f32 %v1108, 2.1237322e-06
      %v1110 = vadd.f32 %v1109, 0.00028619796
      %v1111 = vmul.f32 %v1108, %v1110
      %v1112 = vadd.f32 %v1111, 0.0036580483
      %v1113 = vmul.f32 %v1108, %v1112
      %v1114 = vadd.f32 %v1113, 0.05243302
      %v1115 = vmul.f32 %v1108, %v1114
      %v1116 = vadd.f32 %v1115, 0.18741608
      %v1117 = vmul.f32 %v1108, %v1116
      %v1118 = vadd.f32 %v1117, 1.1283791
      %v1119 = vmul.f32 %v584, %v1118
      %v1120 = vmul.f32 %v1108, 3.8918573e-05
      %v1121 = vadd.f32 %v1120, 0.001143296
      %v1122 = vmul.f32 %v1108, %v1121
      %v1123 = vadd.f32 %v1122, 0.014752088
      %v1124 = vmul.f32 %v1108, %v1123
      %v1125 = vadd.f32 %v1124, 0.112945676
      %v1126 = vmul.f32 %v1108, %v1125
      %v1127 = vadd.f32 %v1126, 0.4994258
      %v1128 = vmul.f32 %v1108, %v1127
      %v1129 = vadd.f32 %v1128, 1.0
      %v1130 = vrcp.pop %v1129
      %v1131 = vmul.f32 %v1129, %v1130
      %v1132 = vsub.f32 1.0, %v1131
      %v1133 = vmul.f32 %v1130, %v1132
      %v1134 = vadd.f32 %v1130, %v1133
      %vm1135 = vweird.f32 %v1129
      %vm1136 = vweird.f32 %v1130
      %vm1137 = vmor %vm1135, %vm1136
      %v1138 = vsel %vm1137, %v1130, %v1134
      %v1139 = vand.u32 2147483647, %v1129
      %vm1140 = vcmp.eq.f32.partialorder %v1139, 8.507059e+37
      %v1141 = vand.u32 %v1129, 2147483648
      %v1142 = vor.u32 1.1754944e-38, %v1141
      %v1143 = vsel %vm1140, %v1142, %v1138
      %v1144 = vmul.f32 %v1119, %v1143
      %v1145 = vmin.f32 %v1144, 1.0
      %v1146 = vmax.f32 %v1145, -1.0
      %v1147 = vmul.f32 %v585, %v585
      %v1148 = vmin.f32 16.0, %v1147
      %v1149 = vmul.f32 %v1148, 2.1237322e-06
      %v1150 = vadd.f32 %v1149, 0.00028619796
      %v1151 = vmul.f32 %v1148, %v1150
      %v1152 = vadd.f32 %v1151, 0.0036580483
      %v1153 = vmul.f32 %v1148, %v1152
      %v1154 = vadd.f32 %v1153, 0.05243302
      %v1155 = vmul.f32 %v1148, %v1154
      %v1156 = vadd.f32 %v1155, 0.18741608
      %v1157 = vmul.f32 %v1148, %v1156
      %v1158 = vadd.f32 %v1157, 1.1283791
      %v1159 = vmul.f32 %v585, %v1158
      %v1160 = vmul.f32 %v1148, 3.8918573e-05
      %v1161 = vadd.f32 %v1160, 0.001143296
      %v1162 = vmul.f32 %v1148, %v1161
      %v1163 = vadd.f32 %v1162, 0.014752088
      %v1164 = vmul.f32 %v1148, %v1163
      %v1165 = vadd.f32 %v1164, 0.112945676
      %v1166 = vmul.f32 %v1148, %v1165
      %v1167 = vadd.f32 %v1166, 0.4994258
      %v1168 = vmul.f32 %v1148, %v1167
      %v1169 = vadd.f32 %v1168, 1.0
      %v1170 = vrcp.pop %v1169
      %v1171 = vmul.f32 %v1169, %v1170
      %v1172 = vsub.f32 1.0, %v1171
      %v1173 = vmul.f32 %v1170, %v1172
      %v1174 = vadd.f32 %v1170, %v1173
      %vm1175 = vweird.f32 %v1169
      %vm1176 = vweird.f32 %v1170
      %vm1177 = vmor %vm1175, %vm1176
      %v1178 = vsel %vm1177, %v1170, %v1174
      %v1179 = vand.u32 2147483647, %v1169
      %vm1180 = vcmp.eq.f32.partialorder %v1179, 8.507059e+37
      %v1181 = vand.u32 %v1169, 2147483648
      %v1182 = vor.u32 1.1754944e-38, %v1181
      %v1183 = vsel %vm1180, %v1182, %v1178
      %v1184 = vmul.f32 %v1159, %v1183
      %v1185 = vmin.f32 %v1184, 1.0
      %v1186 = vmax.f32 %v1185, -1.0
      %v1187 = vmul.f32 %v586, %v586
      %v1188 = vmin.f32 16.0, %v1187
      %v1189 = vmul.f32 %v1188, 2.1237322e-06
      %v1190 = vadd.f32 %v1189, 0.00028619796
      %v1191 = vmul.f32 %v1188, %v1190
      %v1192 = vadd.f32 %v1191, 0.0036580483
      %v1193 = vmul.f32 %v1188, %v1192
      %v1194 = vadd.f32 %v1193, 0.05243302
      %v1195 = vmul.f32 %v1188, %v1194
      %v1196 = vadd.f32 %v1195, 0.18741608
      %v1197 = vmul.f32 %v1188, %v1196
      %v1198 = vadd.f32 %v1197, 1.1283791
      %v1199 = vmul.f32 %v586, %v1198
      %v1200 = vmul.f32 %v1188, 3.8918573e-05
      %v1201 = vadd.f32 %v1200, 0.001143296
      %v1202 = vmul.f32 %v1188, %v1201
      %v1203 = vadd.f32 %v1202, 0.014752088
      %v1204 = vmul.f32 %v1188, %v1203
      %v1205 = vadd.f32 %v1204, 0.112945676
      %v1206 = vmul.f32 %v1188, %v1205
      %v1207 = vadd.f32 %v1206, 0.4994258
      %v1208 = vmul.f32 %v1188, %v1207
      %v1209 = vadd.f32 %v1208, 1.0
      %v1210 = vrcp.pop %v1209
      %v1211 = vmul.f32 %v1209, %v1210
      %v1212 = vsub.f32 1.0, %v1211
      %v1213 = vmul.f32 %v1210, %v1212
      %v1214 = vadd.f32 %v1210, %v1213
      %vm1215 = vweird.f32 %v1209
      %vm1216 = vweird.f32 %v1210
      %vm1217 = vmor %vm1215, %vm1216
      %v1218 = vsel %vm1217, %v1210, %v1214
      %v1219 = vand.u32 2147483647, %v1209
      %vm1220 = vcmp.eq.f32.partialorder %v1219, 8.507059e+37
      %v1221 = vand.u32 %v1209, 2147483648
      %v1222 = vor.u32 1.1754944e-38, %v1221
      %v1223 = vsel %vm1220, %v1222, %v1218
      %v1224 = vmul.f32 %v1199, %v1223
      %v1225 = vmin.f32 %v1224, 1.0
      %v1226 = vmax.f32 %v1225, -1.0
      %v1227 = vadd.f32 %v626, 1.0
      %v1228 = vadd.f32 %v666, 1.0
      %v1229 = vadd.f32 %v706, 1.0
      %v1230 = vadd.f32 %v746, 1.0
      %v1231 = vadd.f32 %v786, 1.0
      %v1232 = vadd.f32 %v826, 1.0
      %v1233 = vadd.f32 %v866, 1.0
      %v1234 = vadd.f32 %v906, 1.0
      %v1235 = vadd.f32 %v946, 1.0
      %v1236 = vadd.f32 %v986, 1.0
      %v1237 = vadd.f32 %v1026, 1.0
      %v1238 = vadd.f32 %v1066, 1.0
      %v1239 = vadd.f32 %v1106, 1.0
      %v1240 = vadd.f32 %v1146, 1.0
      %v1241 = vadd.f32 %v1186, 1.0
      %v1242 = vadd.f32 %v1226, 1.0
      %v1243 = vmul.f32 %v555, %v1227
      %v1244 = vmul.f32 %v556, %v1228
      %v1245 = vmul.f32 %v557, %v1229
      %v1246 = vmul.f32 %v558, %v1230
      %v1247 = vmul.f32 %v559, %v1231
      %v1248 = vmul.f32 %v560, %v1232
      %v1249 = vmul.f32 %v561, %v1233
      %v1250 = vmul.f32 %v562, %v1234
      %v1251 = vmul.f32 %v563, %v1235
      %v1252 = vmul.f32 %v564, %v1236
      %v1253 = vmul.f32 %v565, %v1237
      %v1254 = vmul.f32 %v566, %v1238
      %v1255 = vmul.f32 %v567, %v1239
      %v1256 = vmul.f32 %v568, %v1240
      %v1257 = vmul.f32 %v569, %v1241
      %v1258 = vmul.f32 %v570, %v1242
      %vm1259 = vcmask 130048
      %1260 = vst.msk [vmem:[#allocation2 + $0x10] sm:$0xff] %vm1259, %v1243
      %1261 = vst.msk [vmem:[#allocation2 + $0x18] sm:$0xff] %vm1259, %v1244
      %1262 = vst.msk [vmem:[#allocation2 + $0x20] sm:$0xff] %vm1259, %v1245
      %1263 = vst.msk [vmem:[#allocation2 + $0x28] sm:$0xff] %vm1259, %v1246
      %1264 = vst.msk [vmem:[#allocation2 + $0x30] sm:$0xff] %vm1259, %v1247
      %1265 = vst.msk [vmem:[#allocation2 + $0x38] sm:$0xff] %vm1259, %v1248
      %1266 = vst.msk [vmem:[#allocation2 + $0x40] sm:$0xff] %vm1259, %v1249
      %1267 = vst.msk [vmem:[#allocation2 + $0x48] sm:$0xff] %vm1259, %v1250
      %1268 = vst.msk [vmem:[#allocation2 + $0x50] sm:$0xff] %vm1259, %v1251
      %1269 = vst.msk [vmem:[#allocation2 + $0x58] sm:$0xff] %vm1259, %v1252
      %1270 = vst.msk [vmem:[#allocation2 + $0x60] sm:$0xff] %vm1259, %v1253
      %1271 = vst.msk [vmem:[#allocation2 + $0x68] sm:$0xff] %vm1259, %v1254
      %1272 = vst.msk [vmem:[#allocation2 + $0x70] sm:$0xff] %vm1259, %v1255
      %1273 = vst.msk [vmem:[#allocation2 + $0x78] sm:$0xff] %vm1259, %v1256
      %1274 = vst.msk [vmem:[#allocation2 + $0x80] sm:$0xff] %vm1259, %v1257
      %1275 = vst.msk [vmem:[#allocation2 + $0x88] sm:$0xff] %vm1259, %v1258
      %p1276 = scmp.eq.s32.totalorder %s22, 0
      // Predicated region
      $region45: #{tpu_custom_call.1} parent=43 // pred_check
        %p1277 = pneg %p1276
      $region46: #{tpu_custom_call.1} parent=43 // pred_check_branch
        %1279 = sbr.rel (%p1277) target = $region48
      $region47: #{tpu_custom_call.1} parent=43 // pred_region
        %1280 = vst.msk [vmem:[#allocation2] sm:$0xff] %vm1259, 0.0
        %1281 = vst.msk [vmem:[#allocation2 + $0x8] sm:$0xff] %vm1259, 0.0
      $region48: #{tpu_custom_call.1} parent=43 // pred_fallthru
        _
      %p1282 = scmp.gt.s32.totalorder %s22, 0
      // Predicated region
      $region49: #{tpu_custom_call.1} parent=43 // pred_check
        %p1283 = pneg %p1282
      $region50: #{tpu_custom_call.1} parent=43 // pred_check_branch
        %1285 = sbr.rel (%p1283) target = $region52
      $region51: #{tpu_custom_call.1} parent=43 // pred_region
        %v1286 = vld [vmem:[%s385] sm:$0xf]
        %v1287 = vld [vmem:[%s385 + $0x4] sm:$0xf]
        %v1290 = vunpack.c.l.b16 %v1286
        %v1291 = vunpack.c.l.b16 %v1287
        %v1292 = vpack.c.b16 %v1291, %v1290
        %v1294 = vsel %vm477, %v1292, 0
        %1296 = vmatpush.bf16.msra.mxu0 0
        %1297 = vmatpush.bf16.msra.mxu0 0
        %1298 = vmatpush.bf16.msra.mxu0 0
        %1299 = vmatpush.bf16.msra.mxu0 0
        %1300 = vmatpush.bf16.msra.mxu0 0
        %1301 = vmatpush.bf16.msra.mxu0 0
        %1302 = vmatpush.bf16.msra.mxu0 0
        %1303 = vmatpush.bf16.msra.mxu0 %v504
        %1304 = vmatmul.bf16.gmra.mxu0 %v1294
        %v1305 = vpop.f32.mrf.mxu0
        %v1306 = vadd.f32 0.0, %v1305
        %v1307 = vpop.f32.mrf.mxu0
        %v1308 = vadd.f32 0.0, %v1307
        %1309 = vdwg.mxu0
        %v1310 = vmul.f32 %v1306, 0.5
        %v1311 = vmul.f32 %v1308, 0.5
        %v1312 = vmul.f32 %v1306, 0.70710677
        %v1313 = vmul.f32 %v1308, 0.70710677
        %v1314 = vmul.f32 %v1312, %v1312
        %v1315 = vmin.f32 16.0, %v1314
        %v1316 = vmul.f32 %v1315, 2.1237322e-06
        %v1317 = vadd.f32 %v1316, 0.00028619796
        %v1318 = vmul.f32 %v1315, %v1317
        %v1319 = vadd.f32 %v1318, 0.0036580483
        %v1320 = vmul.f32 %v1315, %v1319
        %v1321 = vadd.f32 %v1320, 0.05243302
        %v1322 = vmul.f32 %v1315, %v1321
        %v1323 = vadd.f32 %v1322, 0.18741608
        %v1324 = vmul.f32 %v1315, %v1323
        %v1325 = vadd.f32 %v1324, 1.1283791
        %v1326 = vmul.f32 %v1312, %v1325
        %v1327 = vmul.f32 %v1315, 3.8918573e-05
        %v1328 = vadd.f32 %v1327, 0.001143296
        %v1329 = vmul.f32 %v1315, %v1328
        %v1330 = vadd.f32 %v1329, 0.014752088
        %v1331 = vmul.f32 %v1315, %v1330
        %v1332 = vadd.f32 %v1331, 0.112945676
        %v1333 = vmul.f32 %v1315, %v1332
        %v1334 = vadd.f32 %v1333, 0.4994258
        %v1335 = vmul.f32 %v1315, %v1334
        %v1336 = vadd.f32 %v1335, 1.0
        %v1337 = vrcp.pop %v1336
        %v1338 = vmul.f32 %v1336, %v1337
        %v1339 = vsub.f32 1.0, %v1338
        %v1340 = vmul.f32 %v1337, %v1339
        %v1341 = vadd.f32 %v1337, %v1340
        %vm1342 = vweird.f32 %v1336
        %vm1343 = vweird.f32 %v1337
        %vm1344 = vmor %vm1342, %vm1343
        %v1345 = vsel %vm1344, %v1337, %v1341
        %v1346 = vand.u32 2147483647, %v1336
        %vm1347 = vcmp.eq.f32.partialorder %v1346, 8.507059e+37
        %v1348 = vand.u32 %v1336, 2147483648
        %v1349 = vor.u32 1.1754944e-38, %v1348
        %v1350 = vsel %vm1347, %v1349, %v1345
        %v1351 = vmul.f32 %v1326, %v1350
        %v1352 = vmin.f32 %v1351, 1.0
        %v1353 = vmax.f32 %v1352, -1.0
        %v1354 = vmul.f32 %v1313, %v1313
        %v1355 = vmin.f32 16.0, %v1354
        %v1356 = vmul.f32 %v1355, 2.1237322e-06
        %v1357 = vadd.f32 %v1356, 0.00028619796
        %v1358 = vmul.f32 %v1355, %v1357
        %v1359 = vadd.f32 %v1358, 0.0036580483
        %v1360 = vmul.f32 %v1355, %v1359
        %v1361 = vadd.f32 %v1360, 0.05243302
        %v1362 = vmul.f32 %v1355, %v1361
        %v1363 = vadd.f32 %v1362, 0.18741608
        %v1364 = vmul.f32 %v1355, %v1363
        %v1365 = vadd.f32 %v1364, 1.1283791
        %v1366 = vmul.f32 %v1313, %v1365
        %v1367 = vmul.f32 %v1355, 3.8918573e-05
        %v1368 = vadd.f32 %v1367, 0.001143296
        %v1369 = vmul.f32 %v1355, %v1368
        %v1370 = vadd.f32 %v1369, 0.014752088
        %v1371 = vmul.f32 %v1355, %v1370
        %v1372 = vadd.f32 %v1371, 0.112945676
        %v1373 = vmul.f32 %v1355, %v1372
        %v1374 = vadd.f32 %v1373, 0.4994258
        %v1375 = vmul.f32 %v1355, %v1374
        %v1376 = vadd.f32 %v1375, 1.0
        %v1377 = vrcp.pop %v1376
        %v1378 = vmul.f32 %v1376, %v1377
        %v1379 = vsub.f32 1.0, %v1378
        %v1380 = vmul.f32 %v1377, %v1379
        %v1381 = vadd.f32 %v1377, %v1380
        %vm1382 = vweird.f32 %v1376
        %vm1383 = vweird.f32 %v1377
        %vm1384 = vmor %vm1382, %vm1383
        %v1385 = vsel %vm1384, %v1377, %v1381
        %v1386 = vand.u32 2147483647, %v1376
        %vm1387 = vcmp.eq.f32.partialorder %v1386, 8.507059e+37
        %v1388 = vand.u32 %v1376, 2147483648
        %v1389 = vor.u32 1.1754944e-38, %v1388
        %v1390 = vsel %vm1387, %v1389, %v1385
        %v1391 = vmul.f32 %v1366, %v1390
        %v1392 = vmin.f32 %v1391, 1.0
        %v1393 = vmax.f32 %v1392, -1.0
        %v1394 = vadd.f32 %v1353, 1.0
        %v1395 = vadd.f32 %v1393, 1.0
        %v1396 = vmul.f32 %v1310, %v1394
        %v1397 = vmul.f32 %v1311, %v1395
        %1398 = vst.msk [vmem:[#allocation2] sm:$0xff] %vm1259, %v1396
        %1399 = vst.msk [vmem:[#allocation2 + $0x8] sm:$0xff] %vm1259, %v1397
      $region52: #{tpu_custom_call.1} parent=43 // pred_fallthru
        _
      %p1400 = scmp.eq.s32.totalorder %s22, 1
      // Predicated region
      $region53: #{tpu_custom_call.1} parent=43 // pred_check
        %p1401 = pneg %p1400
      $region54: #{tpu_custom_call.1} parent=43 // pred_check_branch
        %1403 = sbr.rel (%p1401) target = $region56
      $region55: #{tpu_custom_call.1} parent=43 // pred_region
        %1404 = vst.msk [vmem:[#allocation2 + $0x90] sm:$0xff] %vm1259, 0.0
        %1405 = vst.msk [vmem:[#allocation2 + $0x98] sm:$0xff] %vm1259, 0.0
      $region56: #{tpu_custom_call.1} parent=43 // pred_fallthru
        _
      %p1406 = scmp.lt.s32.totalorder %s22, 1
      // Predicated region
      $region57: #{tpu_custom_call.1} parent=43 // pred_check
        %p1407 = pneg %p1406
      $region58: #{tpu_custom_call.1} parent=43 // pred_check_branch
        %1409 = sbr.rel (%p1407) target = $region60
      $region59: #{tpu_custom_call.1} parent=43 // pred_region
        %v1410 = vld [vmem:[%s403] sm:$0xf]
        %v1411 = vld [vmem:[%s403 + $0x4] sm:$0xf]
        %v1414 = vunpack.c.l.b16 %v1410
        %v1415 = vunpack.c.l.b16 %v1411
        %v1416 = vpack.c.b16 %v1415, %v1414
        %v1418 = vsel %vm477, %v1416, 0
        %1420 = vmatpush.bf16.msra.mxu0 0
        %1421 = vmatpush.bf16.msra.mxu0 0
        %1422 = vmatpush.bf16.msra.mxu0 0
        %1423 = vmatpush.bf16.msra.mxu0 0
        %1424 = vmatpush.bf16.msra.mxu0 0
        %1425 = vmatpush.bf16.msra.mxu0 0
        %1426 = vmatpush.bf16.msra.mxu0 0
        %1427 = vmatpush.bf16.msra.mxu0 %v504
        %1428 = vmatmul.bf16.gmra.mxu0 %v1418
        %v1429 = vpop.f32.mrf.mxu0
        %v1430 = vadd.f32 0.0, %v1429
        %v1431 = vpop.f32.mrf.mxu0
        %v1432 = vadd.f32 0.0, %v1431
        %1433 = vdwg.mxu0
        %v1434 = vmul.f32 %v1430, 0.5
        %v1435 = vmul.f32 %v1432, 0.5
        %v1436 = vmul.f32 %v1430, 0.70710677
        %v1437 = vmul.f32 %v1432, 0.70710677
        %v1438 = vmul.f32 %v1436, %v1436
        %v1439 = vmin.f32 16.0, %v1438
        %v1440 = vmul.f32 %v1439, 2.1237322e-06
        %v1441 = vadd.f32 %v1440, 0.00028619796
        %v1442 = vmul.f32 %v1439, %v1441
        %v1443 = vadd.f32 %v1442, 0.0036580483
        %v1444 = vmul.f32 %v1439, %v1443
        %v1445 = vadd.f32 %v1444, 0.05243302
        %v1446 = vmul.f32 %v1439, %v1445
        %v1447 = vadd.f32 %v1446, 0.18741608
        %v1448 = vmul.f32 %v1439, %v1447
        %v1449 = vadd.f32 %v1448, 1.1283791
        %v1450 = vmul.f32 %v1436, %v1449
        %v1451 = vmul.f32 %v1439, 3.8918573e-05
        %v1452 = vadd.f32 %v1451, 0.001143296
        %v1453 = vmul.f32 %v1439, %v1452
        %v1454 = vadd.f32 %v1453, 0.014752088
        %v1455 = vmul.f32 %v1439, %v1454
        %v1456 = vadd.f32 %v1455, 0.112945676
        %v1457 = vmul.f32 %v1439, %v1456
        %v1458 = vadd.f32 %v1457, 0.4994258
        %v1459 = vmul.f32 %v1439, %v1458
        %v1460 = vadd.f32 %v1459, 1.0
        %v1461 = vrcp.pop %v1460
        %v1462 = vmul.f32 %v1460, %v1461
        %v1463 = vsub.f32 1.0, %v1462
        %v1464 = vmul.f32 %v1461, %v1463
        %v1465 = vadd.f32 %v1461, %v1464
        %vm1466 = vweird.f32 %v1460
        %vm1467 = vweird.f32 %v1461
        %vm1468 = vmor %vm1466, %vm1467
        %v1469 = vsel %vm1468, %v1461, %v1465
        %v1470 = vand.u32 2147483647, %v1460
        %vm1471 = vcmp.eq.f32.partialorder %v1470, 8.507059e+37
        %v1472 = vand.u32 %v1460, 2147483648
        %v1473 = vor.u32 1.1754944e-38, %v1472
        %v1474 = vsel %vm1471, %v1473, %v1469
        %v1475 = vmul.f32 %v1450, %v1474
        %v1476 = vmin.f32 %v1475, 1.0
        %v1477 = vmax.f32 %v1476, -1.0
        %v1478 = vmul.f32 %v1437, %v1437
        %v1479 = vmin.f32 16.0, %v1478
        %v1480 = vmul.f32 %v1479, 2.1237322e-06
        %v1481 = vadd.f32 %v1480, 0.00028619796
        %v1482 = vmul.f32 %v1479, %v1481
        %v1483 = vadd.f32 %v1482, 0.0036580483
        %v1484 = vmul.f32 %v1479, %v1483
        %v1485 = vadd.f32 %v1484, 0.05243302
        %v1486 = vmul.f32 %v1479, %v1485
        %v1487 = vadd.f32 %v1486, 0.18741608
        %v1488 = vmul.f32 %v1479, %v1487
        %v1489 = vadd.f32 %v1488, 1.1283791
        %v1490 = vmul.f32 %v1437, %v1489
        %v1491 = vmul.f32 %v1479, 3.8918573e-05
        %v1492 = vadd.f32 %v1491, 0.001143296
        %v1493 = vmul.f32 %v1479, %v1492
        %v1494 = vadd.f32 %v1493, 0.014752088
        %v1495 = vmul.f32 %v1479, %v1494
        %v1496 = vadd.f32 %v1495, 0.112945676
        %v1497 = vmul.f32 %v1479, %v1496
        %v1498 = vadd.f32 %v1497, 0.4994258
        %v1499 = vmul.f32 %v1479, %v1498
        %v1500 = vadd.f32 %v1499, 1.0
        %v1501 = vrcp.pop %v1500
        %v1502 = vmul.f32 %v1500, %v1501
        %v1503 = vsub.f32 1.0, %v1502
        %v1504 = vmul.f32 %v1501, %v1503
        %v1505 = vadd.f32 %v1501, %v1504
        %vm1506 = vweird.f32 %v1500
        %vm1507 = vweird.f32 %v1501
        %vm1508 = vmor %vm1506, %vm1507
        %v1509 = vsel %vm1508, %v1501, %v1505
        %v1510 = vand.u32 2147483647, %v1500
        %vm1511 = vcmp.eq.f32.partialorder %v1510, 8.507059e+37
        %v1512 = vand.u32 %v1500, 2147483648
        %v1513 = vor.u32 1.1754944e-38, %v1512
        %v1514 = vsel %vm1511, %v1513, %v1509
        %v1515 = vmul.f32 %v1490, %v1514
        %v1516 = vmin.f32 %v1515, 1.0
        %v1517 = vmax.f32 %v1516, -1.0
        %v1518 = vadd.f32 %v1477, 1.0
        %v1519 = vadd.f32 %v1517, 1.0
        %v1520 = vmul.f32 %v1434, %v1518
        %v1521 = vmul.f32 %v1435, %v1519
        %1522 = vst.msk [vmem:[#allocation2 + $0x90] sm:$0xff] %vm1259, %v1520
        %1523 = vst.msk [vmem:[#allocation2 + $0x98] sm:$0xff] %vm1259, %v1521
      $region60: #{tpu_custom_call.1} parent=43 // pred_fallthru
        _
      %v1524 = vld [vmem:[%s4] sm:$0x7]
      %v1525 = vld [vmem:[%s4 + $0x4] sm:$0x7]
      %v1526 = vld [vmem:[%s4 + $0x8] sm:$0x7]
      %v1527 = vld [vmem:[#allocation2] sm:$0xff]
      %v1528 = vld [vmem:[#allocation2 + $0x8] sm:$0xff]
      %v1529 = vld [vmem:[#allocation2 + $0x10] sm:$0xff]
      %v1530 = vld [vmem:[#allocation2 + $0x18] sm:$0xff]
      %v1531 = vld [vmem:[#allocation2 + $0x20] sm:$0xff]
      %v1532 = vld [vmem:[#allocation2 + $0x28] sm:$0xff]
      %v1533 = vld [vmem:[#allocation2 + $0x30] sm:$0xff]
      %v1534 = vld [vmem:[#allocation2 + $0x38] sm:$0xff]
      %v1535 = vld [vmem:[#allocation2 + $0x40] sm:$0xff]
      %v1536 = vld [vmem:[#allocation2 + $0x48] sm:$0xff]
      %v1537 = vld [vmem:[#allocation2 + $0x50] sm:$0xff]
      %v1538 = vld [vmem:[#allocation2 + $0x58] sm:$0xff]
      %v1539 = vld [vmem:[#allocation2 + $0x60] sm:$0xff]
      %v1540 = vld [vmem:[#allocation2 + $0x68] sm:$0xff]
      %v1541 = vld [vmem:[#allocation2 + $0x70] sm:$0xff]
      %v1542 = vld [vmem:[#allocation2 + $0x78] sm:$0xff]
      %v1543 = vld [vmem:[#allocation2 + $0x80] sm:$0xff]
      %v1544 = vld [vmem:[#allocation2 + $0x88] sm:$0xff]
      %v1545 = vld [vmem:[#allocation2 + $0x90] sm:$0xff]
      %v1546 = vld [vmem:[#allocation2 + $0x98] sm:$0xff]
      %v1547 = vlaneseq
      %v1548 = vshrl.u32 %v1547, 7
      %v1549 = vadd.s32 %v1548, 8
      %v1550 = vperm.slane %v1524, 1
      %v1551 = vmul.f32 %v1527, %v1550
      %v1552 = vmul.f32 %v1528, %v1550
      %v1553 = vmul.f32 %v1529, %v1550
      %v1554 = vmul.f32 %v1530, %v1550
      %v1555 = vmul.f32 %v1531, %v1550
      %v1556 = vmul.f32 %v1532, %v1550
      %v1557 = vmul.f32 %v1533, %v1550
      %v1558 = vmul.f32 %v1534, %v1550
      %v1559 = vmul.f32 %v1535, %v1550
      %v1560 = vmul.f32 %v1536, %v1550
      %v1561 = vmul.f32 %v1537, %v1550
      %v1562 = vmul.f32 %v1538, %v1550
      %v1563 = vmul.f32 %v1539, %v1550
      %v1564 = vmul.f32 %v1540, %v1550
      %v1565 = vmul.f32 %v1541, %v1550
      %v1566 = vmul.f32 %v1542, %v1550
      %v1567 = vperm.slane %v1525, 1
      %v1568 = vmul.f32 %v1529, %v1567
      %v1569 = vmul.f32 %v1530, %v1567
      %v1570 = vmul.f32 %v1531, %v1567
      %v1571 = vmul.f32 %v1532, %v1567
      %v1572 = vmul.f32 %v1533, %v1567
      %v1573 = vmul.f32 %v1534, %v1567
      %v1574 = vmul.f32 %v1535, %v1567
      %v1575 = vmul.f32 %v1536, %v1567
      %v1576 = vmul.f32 %v1537, %v1567
      %v1577 = vmul.f32 %v1538, %v1567
      %v1578 = vmul.f32 %v1539, %v1567
      %v1579 = vmul.f32 %v1540, %v1567
      %v1580 = vmul.f32 %v1541, %v1567
      %v1581 = vmul.f32 %v1542, %v1567
      %v1582 = vmul.f32 %v1543, %v1567
      %v1583 = vmul.f32 %v1544, %v1567
      %v1584 = vadd.f32 %v1551, %v1568
      %v1585 = vadd.f32 %v1552, %v1569
      %v1586 = vadd.f32 %v1553, %v1570
      %v1587 = vadd.f32 %v1554, %v1571
      %v1588 = vadd.f32 %v1555, %v1572
      %v1589 = vadd.f32 %v1556, %v1573
      %v1590 = vadd.f32 %v1557, %v1574
      %v1591 = vadd.f32 %v1558, %v1575
      %v1592 = vadd.f32 %v1559, %v1576
      %v1593 = vadd.f32 %v1560, %v1577
      %v1594 = vadd.f32 %v1561, %v1578
      %v1595 = vadd.f32 %v1562, %v1579
      %v1596 = vadd.f32 %v1563, %v1580
      %v1597 = vadd.f32 %v1564, %v1581
      %v1598 = vadd.f32 %v1565, %v1582
      %v1599 = vadd.f32 %v1566, %v1583
      %v1600 = vperm.slane %v1526, 1
      %v1601 = vmul.f32 %v1531, %v1600
      %v1602 = vmul.f32 %v1532, %v1600
      %v1603 = vmul.f32 %v1533, %v1600
      %v1604 = vmul.f32 %v1534, %v1600
      %v1605 = vmul.f32 %v1535, %v1600
      %v1606 = vmul.f32 %v1536, %v1600
      %v1607 = vmul.f32 %v1537, %v1600
      %v1608 = vmul.f32 %v1538, %v1600
      %v1609 = vmul.f32 %v1539, %v1600
      %v1610 = vmul.f32 %v1540, %v1600
      %v1611 = vmul.f32 %v1541, %v1600
      %v1612 = vmul.f32 %v1542, %v1600
      %v1613 = vmul.f32 %v1543, %v1600
      %v1614 = vmul.f32 %v1544, %v1600
      %v1615 = vmul.f32 %v1545, %v1600
      %v1616 = vmul.f32 %v1546, %v1600
      %v1617 = vadd.f32 %v1584, %v1601
      %v1618 = vadd.f32 %v1585, %v1602
      %v1619 = vadd.f32 %v1586, %v1603
      %v1620 = vadd.f32 %v1587, %v1604
      %v1621 = vadd.f32 %v1588, %v1605
      %v1622 = vadd.f32 %v1589, %v1606
      %v1623 = vadd.f32 %v1590, %v1607
      %v1624 = vadd.f32 %v1591, %v1608
      %v1625 = vadd.f32 %v1592, %v1609
      %v1626 = vadd.f32 %v1593, %v1610
      %v1627 = vadd.f32 %v1594, %v1611
      %v1628 = vadd.f32 %v1595, %v1612
      %v1629 = vadd.f32 %v1596, %v1613
      %v1630 = vadd.f32 %v1597, %v1614
      %v1631 = vadd.f32 %v1598, %v1615
      %v1632 = vadd.f32 %v1599, %v1616
      %v1633 = vrot.slane %v1527, 7
      %v1634 = vrot.slane %v1528, 7
      %v1635 = vrot.slane %v1529, 7
      %v1636 = vrot.slane %v1530, 7
      %v1637 = vrot.slane %v1531, 7
      %v1638 = vrot.slane %v1532, 7
      %v1639 = vrot.slane %v1533, 7
      %v1640 = vrot.slane %v1534, 7
      %v1641 = vrot.slane %v1535, 7
      %v1642 = vrot.slane %v1536, 7
      %v1643 = vrot.slane %v1537, 7
      %v1644 = vrot.slane %v1538, 7
      %v1645 = vrot.slane %v1539, 7
      %v1646 = vrot.slane %v1540, 7
      %v1647 = vrot.slane %v1541, 7
      %v1648 = vrot.slane %v1542, 7
      %v1649 = vrot.slane %v1543, 7
      %v1650 = vrot.slane %v1544, 7
      %v1651 = vrot.slane %v1545, 7
      %v1652 = vrot.slane %v1546, 7
      %vm1653 = vcmp.lt.s32.totalorder %v1548, 1
      %v1654 = vsel %vm1653, %v1651, %v1652
      %v1655 = vsel %vm1653, %v1650, %v1651
      %v1656 = vsel %vm1653, %v1649, %v1650
      %v1657 = vsel %vm1653, %v1648, %v1649
      %v1658 = vsel %vm1653, %v1647, %v1648
      %v1659 = vsel %vm1653, %v1646, %v1647
      %v1660 = vsel %vm1653, %v1645, %v1646
      %v1661 = vsel %vm1653, %v1644, %v1645
      %v1662 = vsel %vm1653, %v1643, %v1644
      %v1663 = vsel %vm1653, %v1642, %v1643
      %v1664 = vsel %vm1653, %v1641, %v1642
      %v1665 = vsel %vm1653, %v1640, %v1641
      %v1666 = vsel %vm1653, %v1639, %v1640
      %v1667 = vsel %vm1653, %v1638, %v1639
      %v1668 = vsel %vm1653, %v1637, %v1638
      %v1669 = vsel %vm1653, %v1636, %v1637
      %v1670 = vsel %vm1653, %v1635, %v1636
      %v1671 = vsel %vm1653, %v1634, %v1635
      %v1672 = vsel %vm1653, %v1633, %v1634
      %v1673 = vsel %vm1653, %v1652, %v1633
      %vm1674 = vcmp.eq.s32.totalorder %v1548, 0
      %vm1675 = vcmp.eq.s32.totalorder %v1549, 0
      %v1676 = vsel %vm1674, 1, 0
      %v1677 = vsel %vm1675, 1, 0
      %vm1678 = vcmp.eq.s32.totalorder %v1676, 1
      %vm1679 = vcmp.eq.s32.totalorder %v1677, 1
      %v1680 = vsel %vm1678, 0.0, %v1673
      %v1681 = vsel %vm1679, 0.0, %v1672
      %v1682 = vsel %vm1678, 0.0, %v1671
      %v1683 = vsel %vm1679, 0.0, %v1670
      %v1684 = vsel %vm1678, 0.0, %v1669
      %v1685 = vsel %vm1679, 0.0, %v1668
      %v1686 = vsel %vm1678, 0.0, %v1667
      %v1687 = vsel %vm1679, 0.0, %v1666
      %v1688 = vsel %vm1678, 0.0, %v1665
      %v1689 = vsel %vm1679, 0.0, %v1664
      %v1690 = vsel %vm1678, 0.0, %v1663
      %v1691 = vsel %vm1679, 0.0, %v1662
      %v1692 = vsel %vm1678, 0.0, %v1661
      %v1693 = vsel %vm1679, 0.0, %v1660
      %v1694 = vsel %vm1678, 0.0, %v1659
      %v1695 = vsel %vm1679, 0.0, %v1658
      %v1696 = vsel %vm1678, 0.0, %v1657
      %v1697 = vsel %vm1679, 0.0, %v1656
      %v1698 = vsel %vm1678, 0.0, %v1655
      %v1699 = vsel %vm1679, 0.0, %v1654
      %v1700 = vperm.slane %v1524, 0
      %v1701 = vmul.f32 %v1680, %v1700
      %v1702 = vmul.f32 %v1681, %v1700
      %v1703 = vmul.f32 %v1682, %v1700
      %v1704 = vmul.f32 %v1683, %v1700
      %v1705 = vmul.f32 %v1684, %v1700
      %v1706 = vmul.f32 %v1685, %v1700
      %v1707 = vmul.f32 %v1686, %v1700
      %v1708 = vmul.f32 %v1687, %v1700
      %v1709 = vmul.f32 %v1688, %v1700
      %v1710 = vmul.f32 %v1689, %v1700
      %v1711 = vmul.f32 %v1690, %v1700
      %v1712 = vmul.f32 %v1691, %v1700
      %v1713 = vmul.f32 %v1692, %v1700
      %v1714 = vmul.f32 %v1693, %v1700
      %v1715 = vmul.f32 %v1694, %v1700
      %v1716 = vmul.f32 %v1695, %v1700
      %v1717 = vadd.f32 %v1617, %v1701
      %v1718 = vadd.f32 %v1618, %v1702
      %v1719 = vadd.f32 %v1619, %v1703
      %v1720 = vadd.f32 %v1620, %v1704
      %v1721 = vadd.f32 %v1621, %v1705
      %v1722 = vadd.f32 %v1622, %v1706
      %v1723 = vadd.f32 %v1623, %v1707
      %v1724 = vadd.f32 %v1624, %v1708
      %v1725 = vadd.f32 %v1625, %v1709
      %v1726 = vadd.f32 %v1626, %v1710
      %v1727 = vadd.f32 %v1627, %v1711
      %v1728 = vadd.f32 %v1628, %v1712
      %v1729 = vadd.f32 %v1629, %v1713
      %v1730 = vadd.f32 %v1630, %v1714
      %v1731 = vadd.f32 %v1631, %v1715
      %v1732 = vadd.f32 %v1632, %v1716
      %v1733 = vperm.slane %v1525, 0
      %v1734 = vmul.f32 %v1682, %v1733
      %v1735 = vmul.f32 %v1683, %v1733
      %v1736 = vmul.f32 %v1684, %v1733
      %v1737 = vmul.f32 %v1685, %v1733
      %v1738 = vmul.f32 %v1686, %v1733
      %v1739 = vmul.f32 %v1687, %v1733
      %v1740 = vmul.f32 %v1688, %v1733
      %v1741 = vmul.f32 %v1689, %v1733
      %v1742 = vmul.f32 %v1690, %v1733
      %v1743 = vmul.f32 %v1691, %v1733
      %v1744 = vmul.f32 %v1692, %v1733
      %v1745 = vmul.f32 %v1693, %v1733
      %v1746 = vmul.f32 %v1694, %v1733
      %v1747 = vmul.f32 %v1695, %v1733
      %v1748 = vmul.f32 %v1696, %v1733
      %v1749 = vmul.f32 %v1697, %v1733
      %v1750 = vadd.f32 %v1717, %v1734
      %v1751 = vadd.f32 %v1718, %v1735
      %v1752 = vadd.f32 %v1719, %v1736
      %v1753 = vadd.f32 %v1720, %v1737
      %v1754 = vadd.f32 %v1721, %v1738
      %v1755 = vadd.f32 %v1722, %v1739
      %v1756 = vadd.f32 %v1723, %v1740
      %v1757 = vadd.f32 %v1724, %v1741
      %v1758 = vadd.f32 %v1725, %v1742
      %v1759 = vadd.f32 %v1726, %v1743
      %v1760 = vadd.f32 %v1727, %v1744
      %v1761 = vadd.f32 %v1728, %v1745
      %v1762 = vadd.f32 %v1729, %v1746
      %v1763 = vadd.f32 %v1730, %v1747
      %v1764 = vadd.f32 %v1731, %v1748
      %v1765 = vadd.f32 %v1732, %v1749
      %v1766 = vperm.slane %v1526, 0
      %v1767 = vmul.f32 %v1684, %v1766
      %v1768 = vmul.f32 %v1685, %v1766
      %v1769 = vmul.f32 %v1686, %v1766
      %v1770 = vmul.f32 %v1687, %v1766
      %v1771 = vmul.f32 %v1688, %v1766
      %v1772 = vmul.f32 %v1689, %v1766
      %v1773 = vmul.f32 %v1690, %v1766
      %v1774 = vmul.f32 %v1691, %v1766
      %v1775 = vmul.f32 %v1692, %v1766
      %v1776 = vmul.f32 %v1693, %v1766
      %v1777 = vmul.f32 %v1694, %v1766
      %v1778 = vmul.f32 %v1695, %v1766
      %v1779 = vmul.f32 %v1696, %v1766
      %v1780 = vmul.f32 %v1697, %v1766
      %v1781 = vmul.f32 %v1698, %v1766
      %v1782 = vmul.f32 %v1699, %v1766
      %v1783 = vadd.f32 %v1750, %v1767
      %v1784 = vadd.f32 %v1751, %v1768
      %v1785 = vadd.f32 %v1752, %v1769
      %v1786 = vadd.f32 %v1753, %v1770
      %v1787 = vadd.f32 %v1754, %v1771
      %v1788 = vadd.f32 %v1755, %v1772
      %v1789 = vadd.f32 %v1756, %v1773
      %v1790 = vadd.f32 %v1757, %v1774
      %v1791 = vadd.f32 %v1758, %v1775
      %v1792 = vadd.f32 %v1759, %v1776
      %v1793 = vadd.f32 %v1760, %v1777
      %v1794 = vadd.f32 %v1761, %v1778
      %v1795 = vadd.f32 %v1762, %v1779
      %v1796 = vadd.f32 %v1763, %v1780
      %v1797 = vadd.f32 %v1764, %v1781
      %v1798 = vadd.f32 %v1765, %v1782
      %v1799 = vrot.slane %v1527, 1
      %v1800 = vrot.slane %v1528, 1
      %v1801 = vrot.slane %v1529, 1
      %v1802 = vrot.slane %v1530, 1
      %v1803 = vrot.slane %v1531, 1
      %v1804 = vrot.slane %v1532, 1
      %v1805 = vrot.slane %v1533, 1
      %v1806 = vrot.slane %v1534, 1
      %v1807 = vrot.slane %v1535, 1
      %v1808 = vrot.slane %v1536, 1
      %v1809 = vrot.slane %v1537, 1
      %v1810 = vrot.slane %v1538, 1
      %v1811 = vrot.slane %v1539, 1
      %v1812 = vrot.slane %v1540, 1
      %v1813 = vrot.slane %v1541, 1
      %v1814 = vrot.slane %v1542, 1
      %v1815 = vrot.slane %v1543, 1
      %v1816 = vrot.slane %v1544, 1
      %v1817 = vrot.slane %v1545, 1
      %v1818 = vrot.slane %v1546, 1
      %vm1819 = vcmp.lt.s32.totalorder %v1548, 7
      %v1820 = vsel %vm1819, %v1817, %v1818
      %v1821 = vsel %vm1819, %v1816, %v1817
      %v1822 = vsel %vm1819, %v1815, %v1816
      %v1823 = vsel %vm1819, %v1814, %v1815
      %v1824 = vsel %vm1819, %v1813, %v1814
      %v1825 = vsel %vm1819, %v1812, %v1813
      %v1826 = vsel %vm1819, %v1811, %v1812
      %v1827 = vsel %vm1819, %v1810, %v1811
      %v1828 = vsel %vm1819, %v1809, %v1810
      %v1829 = vsel %vm1819, %v1808, %v1809
      %v1830 = vsel %vm1819, %v1807, %v1808
      %v1831 = vsel %vm1819, %v1806, %v1807
      %v1832 = vsel %vm1819, %v1805, %v1806
      %v1833 = vsel %vm1819, %v1804, %v1805
      %v1834 = vsel %vm1819, %v1803, %v1804
      %v1835 = vsel %vm1819, %v1802, %v1803
      %v1836 = vsel %vm1819, %v1801, %v1802
      %v1837 = vsel %vm1819, %v1800, %v1801
      %v1838 = vsel %vm1819, %v1799, %v1800
      %v1839 = vsel %vm1819, %v1818, %v1799
      %vm1840 = vcmp.eq.s32.totalorder %v1548, 15
      %vm1841 = vcmp.eq.s32.totalorder %v1549, 15
      %v1842 = vsel %vm1840, 1, 0
      %v1843 = vsel %vm1841, 1, 0
      %vm1844 = vcmp.eq.s32.totalorder %v1842, 1
      %vm1845 = vcmp.eq.s32.totalorder %v1843, 1
      %v1846 = vsel %vm1844, 0.0, %v1838
      %v1847 = vsel %vm1845, 0.0, %v1837
      %v1848 = vsel %vm1844, 0.0, %v1836
      %v1849 = vsel %vm1845, 0.0, %v1835
      %v1850 = vsel %vm1844, 0.0, %v1834
      %v1851 = vsel %vm1845, 0.0, %v1833
      %v1852 = vsel %vm1844, 0.0, %v1832
      %v1853 = vsel %vm1845, 0.0, %v1831
      %v1854 = vsel %vm1844, 0.0, %v1830
      %v1855 = vsel %vm1845, 0.0, %v1829
      %v1856 = vsel %vm1844, 0.0, %v1828
      %v1857 = vsel %vm1845, 0.0, %v1827
      %v1858 = vsel %vm1844, 0.0, %v1826
      %v1859 = vsel %vm1845, 0.0, %v1825
      %v1860 = vsel %vm1844, 0.0, %v1824
      %v1861 = vsel %vm1845, 0.0, %v1823
      %v1862 = vsel %vm1844, 0.0, %v1822
      %v1863 = vsel %vm1845, 0.0, %v1821
      %v1864 = vsel %vm1844, 0.0, %v1820
      %v1865 = vsel %vm1845, 0.0, %v1839
      %v1866 = vperm.slane %v1524, 2
      %v1867 = vmul.f32 %v1846, %v1866
      %v1868 = vmul.f32 %v1847, %v1866
      %v1869 = vmul.f32 %v1848, %v1866
      %v1870 = vmul.f32 %v1849, %v1866
      %v1871 = vmul.f32 %v1850, %v1866
      %v1872 = vmul.f32 %v1851, %v1866
      %v1873 = vmul.f32 %v1852, %v1866
      %v1874 = vmul.f32 %v1853, %v1866
      %v1875 = vmul.f32 %v1854, %v1866
      %v1876 = vmul.f32 %v1855, %v1866
      %v1877 = vmul.f32 %v1856, %v1866
      %v1878 = vmul.f32 %v1857, %v1866
      %v1879 = vmul.f32 %v1858, %v1866
      %v1880 = vmul.f32 %v1859, %v1866
      %v1881 = vmul.f32 %v1860, %v1866
      %v1882 = vmul.f32 %v1861, %v1866
      %v1883 = vadd.f32 %v1783, %v1867
      %v1884 = vadd.f32 %v1784, %v1868
      %v1885 = vadd.f32 %v1785, %v1869
      %v1886 = vadd.f32 %v1786, %v1870
      %v1887 = vadd.f32 %v1787, %v1871
      %v1888 = vadd.f32 %v1788, %v1872
      %v1889 = vadd.f32 %v1789, %v1873
      %v1890 = vadd.f32 %v1790, %v1874
      %v1891 = vadd.f32 %v1791, %v1875
      %v1892 = vadd.f32 %v1792, %v1876
      %v1893 = vadd.f32 %v1793, %v1877
      %v1894 = vadd.f32 %v1794, %v1878
      %v1895 = vadd.f32 %v1795, %v1879
      %v1896 = vadd.f32 %v1796, %v1880
      %v1897 = vadd.f32 %v1797, %v1881
      %v1898 = vadd.f32 %v1798, %v1882
      %v1899 = vperm.slane %v1525, 2
      %v1900 = vmul.f32 %v1848, %v1899
      %v1901 = vmul.f32 %v1849, %v1899
      %v1902 = vmul.f32 %v1850, %v1899
      %v1903 = vmul.f32 %v1851, %v1899
      %v1904 = vmul.f32 %v1852, %v1899
      %v1905 = vmul.f32 %v1853, %v1899
      %v1906 = vmul.f32 %v1854, %v1899
      %v1907 = vmul.f32 %v1855, %v1899
      %v1908 = vmul.f32 %v1856, %v1899
      %v1909 = vmul.f32 %v1857, %v1899
      %v1910 = vmul.f32 %v1858, %v1899
      %v1911 = vmul.f32 %v1859, %v1899
      %v1912 = vmul.f32 %v1860, %v1899
      %v1913 = vmul.f32 %v1861, %v1899
      %v1914 = vmul.f32 %v1862, %v1899
      %v1915 = vmul.f32 %v1863, %v1899
      %v1916 = vadd.f32 %v1883, %v1900
      %v1917 = vadd.f32 %v1884, %v1901
      %v1918 = vadd.f32 %v1885, %v1902
      %v1919 = vadd.f32 %v1886, %v1903
      %v1920 = vadd.f32 %v1887, %v1904
      %v1921 = vadd.f32 %v1888, %v1905
      %v1922 = vadd.f32 %v1889, %v1906
      %v1923 = vadd.f32 %v1890, %v1907
      %v1924 = vadd.f32 %v1891, %v1908
      %v1925 = vadd.f32 %v1892, %v1909
      %v1926 = vadd.f32 %v1893, %v1910
      %v1927 = vadd.f32 %v1894, %v1911
      %v1928 = vadd.f32 %v1895, %v1912
      %v1929 = vadd.f32 %v1896, %v1913
      %v1930 = vadd.f32 %v1897, %v1914
      %v1931 = vadd.f32 %v1898, %v1915
      %v1932 = vperm.slane %v1526, 2
      %v1933 = vmul.f32 %v1850, %v1932
      %v1934 = vmul.f32 %v1851, %v1932
      %v1935 = vmul.f32 %v1852, %v1932
      %v1936 = vmul.f32 %v1853, %v1932
      %v1937 = vmul.f32 %v1854, %v1932
      %v1938 = vmul.f32 %v1855, %v1932
      %v1939 = vmul.f32 %v1856, %v1932
      %v1940 = vmul.f32 %v1857, %v1932
      %v1941 = vmul.f32 %v1858, %v1932
      %v1942 = vmul.f32 %v1859, %v1932
      %v1943 = vmul.f32 %v1860, %v1932
      %v1944 = vmul.f32 %v1861, %v1932
      %v1945 = vmul.f32 %v1862, %v1932
      %v1946 = vmul.f32 %v1863, %v1932
      %v1947 = vmul.f32 %v1864, %v1932
      %v1948 = vmul.f32 %v1865, %v1932
      %v1949 = vadd.f32 %v1916, %v1933
      %v1950 = vadd.f32 %v1917, %v1934
      %v1951 = vadd.f32 %v1918, %v1935
      %v1952 = vadd.f32 %v1919, %v1936
      %v1953 = vadd.f32 %v1920, %v1937
      %v1954 = vadd.f32 %v1921, %v1938
      %v1955 = vadd.f32 %v1922, %v1939
      %v1956 = vadd.f32 %v1923, %v1940
      %v1957 = vadd.f32 %v1924, %v1941
      %v1958 = vadd.f32 %v1925, %v1942
      %v1959 = vadd.f32 %v1926, %v1943
      %v1960 = vadd.f32 %v1927, %v1944
      %v1961 = vadd.f32 %v1928, %v1945
      %v1962 = vadd.f32 %v1929, %v1946
      %v1963 = vadd.f32 %v1930, %v1947
      %v1964 = vadd.f32 %v1931, %v1948
      %v1965 = vmul.f32 %v1949, 0.5
      %v1966 = vmul.f32 %v1950, 0.5
      %v1967 = vmul.f32 %v1951, 0.5
      %v1968 = vmul.f32 %v1952, 0.5
      %v1969 = vmul.f32 %v1953, 0.5
      %v1970 = vmul.f32 %v1954, 0.5
      %v1971 = vmul.f32 %v1955, 0.5
      %v1972 = vmul.f32 %v1956, 0.5
      %v1973 = vmul.f32 %v1957, 0.5
      %v1974 = vmul.f32 %v1958, 0.5
      %v1975 = vmul.f32 %v1959, 0.5
      %v1976 = vmul.f32 %v1960, 0.5
      %v1977 = vmul.f32 %v1961, 0.5
      %v1978 = vmul.f32 %v1962, 0.5
      %v1979 = vmul.f32 %v1963, 0.5
      %v1980 = vmul.f32 %v1964, 0.5
      %v1981 = vmul.f32 %v1949, 0.70710677
      %v1982 = vmul.f32 %v1950, 0.70710677
      %v1983 = vmul.f32 %v1951, 0.70710677
      %v1984 = vmul.f32 %v1952, 0.70710677
      %v1985 = vmul.f32 %v1953, 0.70710677
      %v1986 = vmul.f32 %v1954, 0.70710677
      %v1987 = vmul.f32 %v1955, 0.70710677
      %v1988 = vmul.f32 %v1956, 0.70710677
      %v1989 = vmul.f32 %v1957, 0.70710677
      %v1990 = vmul.f32 %v1958, 0.70710677
      %v1991 = vmul.f32 %v1959, 0.70710677
      %v1992 = vmul.f32 %v1960, 0.70710677
      %v1993 = vmul.f32 %v1961, 0.70710677
      %v1994 = vmul.f32 %v1962, 0.70710677
      %v1995 = vmul.f32 %v1963, 0.70710677
      %v1996 = vmul.f32 %v1964, 0.70710677
      %v1997 = vmul.f32 %v1981, %v1981
      %v1998 = vmin.f32 16.0, %v1997
      %v1999 = vmul.f32 %v1998, 2.1237322e-06
      %v2000 = vadd.f32 %v1999, 0.00028619796
      %v2001 = vmul.f32 %v1998, %v2000
      %v2002 = vadd.f32 %v2001, 0.0036580483
      %v2003 = vmul.f32 %v1998, %v2002
      %v2004 = vadd.f32 %v2003, 0.05243302
      %v2005 = vmul.f32 %v1998, %v2004
      %v2006 = vadd.f32 %v2005, 0.18741608
      %v2007 = vmul.f32 %v1998, %v2006
      %v2008 = vadd.f32 %v2007, 1.1283791
      %v2009 = vmul.f32 %v1981, %v2008
      %v2010 = vmul.f32 %v1998, 3.8918573e-05
      %v2011 = vadd.f32 %v2010, 0.001143296
      %v2012 = vmul.f32 %v1998, %v2011
      %v2013 = vadd.f32 %v2012, 0.014752088
      %v2014 = vmul.f32 %v1998, %v2013
      %v2015 = vadd.f32 %v2014, 0.112945676
      %v2016 = vmul.f32 %v1998, %v2015
      %v2017 = vadd.f32 %v2016, 0.4994258
      %v2018 = vmul.f32 %v1998, %v2017
      %v2019 = vadd.f32 %v2018, 1.0
      %v2020 = vrcp.pop %v2019
      %v2021 = vmul.f32 %v2019, %v2020
      %v2022 = vsub.f32 1.0, %v2021
      %v2023 = vmul.f32 %v2020, %v2022
      %v2024 = vadd.f32 %v2020, %v2023
      %vm2025 = vweird.f32 %v2019
      %vm2026 = vweird.f32 %v2020
      %vm2027 = vmor %vm2025, %vm2026
      %v2028 = vsel %vm2027, %v2020, %v2024
      %v2029 = vand.u32 2147483647, %v2019
      %vm2030 = vcmp.eq.f32.partialorder %v2029, 8.507059e+37
      %v2031 = vand.u32 %v2019, 2147483648
      %v2032 = vor.u32 1.1754944e-38, %v2031
      %v2033 = vsel %vm2030, %v2032, %v2028
      %v2034 = vmul.f32 %v2009, %v2033
      %v2035 = vmin.f32 %v2034, 1.0
      %v2036 = vmax.f32 %v2035, -1.0
      %v2037 = vmul.f32 %v1982, %v1982
      %v2038 = vmin.f32 16.0, %v2037
      %v2039 = vmul.f32 %v2038, 2.1237322e-06
      %v2040 = vadd.f32 %v2039, 0.00028619796
      %v2041 = vmul.f32 %v2038, %v2040
      %v2042 = vadd.f32 %v2041, 0.0036580483
      %v2043 = vmul.f32 %v2038, %v2042
      %v2044 = vadd.f32 %v2043, 0.05243302
      %v2045 = vmul.f32 %v2038, %v2044
      %v2046 = vadd.f32 %v2045, 0.18741608
      %v2047 = vmul.f32 %v2038, %v2046
      %v2048 = vadd.f32 %v2047, 1.1283791
      %v2049 = vmul.f32 %v1982, %v2048
      %v2050 = vmul.f32 %v2038, 3.8918573e-05
      %v2051 = vadd.f32 %v2050, 0.001143296
      %v2052 = vmul.f32 %v2038, %v2051
      %v2053 = vadd.f32 %v2052, 0.014752088
      %v2054 = vmul.f32 %v2038, %v2053
      %v2055 = vadd.f32 %v2054, 0.112945676
      %v2056 = vmul.f32 %v2038, %v2055
      %v2057 = vadd.f32 %v2056, 0.4994258
      %v2058 = vmul.f32 %v2038, %v2057
      %v2059 = vadd.f32 %v2058, 1.0
      %v2060 = vrcp.pop %v2059
      %v2061 = vmul.f32 %v2059, %v2060
      %v2062 = vsub.f32 1.0, %v2061
      %v2063 = vmul.f32 %v2060, %v2062
      %v2064 = vadd.f32 %v2060, %v2063
      %vm2065 = vweird.f32 %v2059
      %vm2066 = vweird.f32 %v2060
      %vm2067 = vmor %vm2065, %vm2066
      %v2068 = vsel %vm2067, %v2060, %v2064
      %v2069 = vand.u32 2147483647, %v2059
      %vm2070 = vcmp.eq.f32.partialorder %v2069, 8.507059e+37
      %v2071 = vand.u32 %v2059, 2147483648
      %v2072 = vor.u32 1.1754944e-38, %v2071
      %v2073 = vsel %vm2070, %v2072, %v2068
      %v2074 = vmul.f32 %v2049, %v2073
      %v2075 = vmin.f32 %v2074, 1.0
      %v2076 = vmax.f32 %v2075, -1.0
      %v2077 = vmul.f32 %v1983, %v1983
      %v2078 = vmin.f32 16.0, %v2077
      %v2079 = vmul.f32 %v2078, 2.1237322e-06
      %v2080 = vadd.f32 %v2079, 0.00028619796
      %v2081 = vmul.f32 %v2078, %v2080
      %v2082 = vadd.f32 %v2081, 0.0036580483
      %v2083 = vmul.f32 %v2078, %v2082
      %v2084 = vadd.f32 %v2083, 0.05243302
      %v2085 = vmul.f32 %v2078, %v2084
      %v2086 = vadd.f32 %v2085, 0.18741608
      %v2087 = vmul.f32 %v2078, %v2086
      %v2088 = vadd.f32 %v2087, 1.1283791
      %v2089 = vmul.f32 %v1983, %v2088
      %v2090 = vmul.f32 %v2078, 3.8918573e-05
      %v2091 = vadd.f32 %v2090, 0.001143296
      %v2092 = vmul.f32 %v2078, %v2091
      %v2093 = vadd.f32 %v2092, 0.014752088
      %v2094 = vmul.f32 %v2078, %v2093
      %v2095 = vadd.f32 %v2094, 0.112945676
      %v2096 = vmul.f32 %v2078, %v2095
      %v2097 = vadd.f32 %v2096, 0.4994258
      %v2098 = vmul.f32 %v2078, %v2097
      %v2099 = vadd.f32 %v2098, 1.0
      %v2100 = vrcp.pop %v2099
      %v2101 = vmul.f32 %v2099, %v2100
      %v2102 = vsub.f32 1.0, %v2101
      %v2103 = vmul.f32 %v2100, %v2102
      %v2104 = vadd.f32 %v2100, %v2103
      %vm2105 = vweird.f32 %v2099
      %vm2106 = vweird.f32 %v2100
      %vm2107 = vmor %vm2105, %vm2106
      %v2108 = vsel %vm2107, %v2100, %v2104
      %v2109 = vand.u32 2147483647, %v2099
      %vm2110 = vcmp.eq.f32.partialorder %v2109, 8.507059e+37
      %v2111 = vand.u32 %v2099, 2147483648
      %v2112 = vor.u32 1.1754944e-38, %v2111
      %v2113 = vsel %vm2110, %v2112, %v2108
      %v2114 = vmul.f32 %v2089, %v2113
      %v2115 = vmin.f32 %v2114, 1.0
      %v2116 = vmax.f32 %v2115, -1.0
      %v2117 = vmul.f32 %v1984, %v1984
      %v2118 = vmin.f32 16.0, %v2117
      %v2119 = vmul.f32 %v2118, 2.1237322e-06
      %v2120 = vadd.f32 %v2119, 0.00028619796
      %v2121 = vmul.f32 %v2118, %v2120
      %v2122 = vadd.f32 %v2121, 0.0036580483
      %v2123 = vmul.f32 %v2118, %v2122
      %v2124 = vadd.f32 %v2123, 0.05243302
      %v2125 = vmul.f32 %v2118, %v2124
      %v2126 = vadd.f32 %v2125, 0.18741608
      %v2127 = vmul.f32 %v2118, %v2126
      %v2128 = vadd.f32 %v2127, 1.1283791
      %v2129 = vmul.f32 %v1984, %v2128
      %v2130 = vmul.f32 %v2118, 3.8918573e-05
      %v2131 = vadd.f32 %v2130, 0.001143296
      %v2132 = vmul.f32 %v2118, %v2131
      %v2133 = vadd.f32 %v2132, 0.014752088
      %v2134 = vmul.f32 %v2118, %v2133
      %v2135 = vadd.f32 %v2134, 0.112945676
      %v2136 = vmul.f32 %v2118, %v2135
      %v2137 = vadd.f32 %v2136, 0.4994258
      %v2138 = vmul.f32 %v2118, %v2137
      %v2139 = vadd.f32 %v2138, 1.0
      %v2140 = vrcp.pop %v2139
      %v2141 = vmul.f32 %v2139, %v2140
      %v2142 = vsub.f32 1.0, %v2141
      %v2143 = vmul.f32 %v2140, %v2142
      %v2144 = vadd.f32 %v2140, %v2143
      %vm2145 = vweird.f32 %v2139
      %vm2146 = vweird.f32 %v2140
      %vm2147 = vmor %vm2145, %vm2146
      %v2148 = vsel %vm2147, %v2140, %v2144
      %v2149 = vand.u32 2147483647, %v2139
      %vm2150 = vcmp.eq.f32.partialorder %v2149, 8.507059e+37
      %v2151 = vand.u32 %v2139, 2147483648
      %v2152 = vor.u32 1.1754944e-38, %v2151
      %v2153 = vsel %vm2150, %v2152, %v2148
      %v2154 = vmul.f32 %v2129, %v2153
      %v2155 = vmin.f32 %v2154, 1.0
      %v2156 = vmax.f32 %v2155, -1.0
      %v2157 = vmul.f32 %v1985, %v1985
      %v2158 = vmin.f32 16.0, %v2157
      %v2159 = vmul.f32 %v2158, 2.1237322e-06
      %v2160 = vadd.f32 %v2159, 0.00028619796
      %v2161 = vmul.f32 %v2158, %v2160
      %v2162 = vadd.f32 %v2161, 0.0036580483
      %v2163 = vmul.f32 %v2158, %v2162
      %v2164 = vadd.f32 %v2163, 0.05243302
      %v2165 = vmul.f32 %v2158, %v2164
      %v2166 = vadd.f32 %v2165, 0.18741608
      %v2167 = vmul.f32 %v2158, %v2166
      %v2168 = vadd.f32 %v2167, 1.1283791
      %v2169 = vmul.f32 %v1985, %v2168
      %v2170 = vmul.f32 %v2158, 3.8918573e-05
      %v2171 = vadd.f32 %v2170, 0.001143296
      %v2172 = vmul.f32 %v2158, %v2171
      %v2173 = vadd.f32 %v2172, 0.014752088
      %v2174 = vmul.f32 %v2158, %v2173
      %v2175 = vadd.f32 %v2174, 0.112945676
      %v2176 = vmul.f32 %v2158, %v2175
      %v2177 = vadd.f32 %v2176, 0.4994258
      %v2178 = vmul.f32 %v2158, %v2177
      %v2179 = vadd.f32 %v2178, 1.0
      %v2180 = vrcp.pop %v2179
      %v2181 = vmul.f32 %v2179, %v2180
      %v2182 = vsub.f32 1.0, %v2181
      %v2183 = vmul.f32 %v2180, %v2182
      %v2184 = vadd.f32 %v2180, %v2183
      %vm2185 = vweird.f32 %v2179
      %vm2186 = vweird.f32 %v2180
      %vm2187 = vmor %vm2185, %vm2186
      %v2188 = vsel %vm2187, %v2180, %v2184
      %v2189 = vand.u32 2147483647, %v2179
      %vm2190 = vcmp.eq.f32.partialorder %v2189, 8.507059e+37
      %v2191 = vand.u32 %v2179, 2147483648
      %v2192 = vor.u32 1.1754944e-38, %v2191
      %v2193 = vsel %vm2190, %v2192, %v2188
      %v2194 = vmul.f32 %v2169, %v2193
      %v2195 = vmin.f32 %v2194, 1.0
      %v2196 = vmax.f32 %v2195, -1.0
      %v2197 = vmul.f32 %v1986, %v1986
      %v2198 = vmin.f32 16.0, %v2197
      %v2199 = vmul.f32 %v2198, 2.1237322e-06
      %v2200 = vadd.f32 %v2199, 0.00028619796
      %v2201 = vmul.f32 %v2198, %v2200
      %v2202 = vadd.f32 %v2201, 0.0036580483
      %v2203 = vmul.f32 %v2198, %v2202
      %v2204 = vadd.f32 %v2203, 0.05243302
      %v2205 = vmul.f32 %v2198, %v2204
      %v2206 = vadd.f32 %v2205, 0.18741608
      %v2207 = vmul.f32 %v2198, %v2206
      %v2208 = vadd.f32 %v2207, 1.1283791
      %v2209 = vmul.f32 %v1986, %v2208
      %v2210 = vmul.f32 %v2198, 3.8918573e-05
      %v2211 = vadd.f32 %v2210, 0.001143296
      %v2212 = vmul.f32 %v2198, %v2211
      %v2213 = vadd.f32 %v2212, 0.014752088
      %v2214 = vmul.f32 %v2198, %v2213
      %v2215 = vadd.f32 %v2214, 0.112945676
      %v2216 = vmul.f32 %v2198, %v2215
      %v2217 = vadd.f32 %v2216, 0.4994258
      %v2218 = vmul.f32 %v2198, %v2217
      %v2219 = vadd.f32 %v2218, 1.0
      %v2220 = vrcp.pop %v2219
      %v2221 = vmul.f32 %v2219, %v2220
      %v2222 = vsub.f32 1.0, %v2221
      %v2223 = vmul.f32 %v2220, %v2222
      %v2224 = vadd.f32 %v2220, %v2223
      %vm2225 = vweird.f32 %v2219
      %vm2226 = vweird.f32 %v2220
      %vm2227 = vmor %vm2225, %vm2226
      %v2228 = vsel %vm2227, %v2220, %v2224
      %v2229 = vand.u32 2147483647, %v2219
      %vm2230 = vcmp.eq.f32.partialorder %v2229, 8.507059e+37
      %v2231 = vand.u32 %v2219, 2147483648
      %v2232 = vor.u32 1.1754944e-38, %v2231
      %v2233 = vsel %vm2230, %v2232, %v2228
      %v2234 = vmul.f32 %v2209, %v2233
      %v2235 = vmin.f32 %v2234, 1.0
      %v2236 = vmax.f32 %v2235, -1.0
      %v2237 = vmul.f32 %v1987, %v1987
      %v2238 = vmin.f32 16.0, %v2237
      %v2239 = vmul.f32 %v2238, 2.1237322e-06
      %v2240 = vadd.f32 %v2239, 0.00028619796
      %v2241 = vmul.f32 %v2238, %v2240
      %v2242 = vadd.f32 %v2241, 0.0036580483
      %v2243 = vmul.f32 %v2238, %v2242
      %v2244 = vadd.f32 %v2243, 0.05243302
      %v2245 = vmul.f32 %v2238, %v2244
      %v2246 = vadd.f32 %v2245, 0.18741608
      %v2247 = vmul.f32 %v2238, %v2246
      %v2248 = vadd.f32 %v2247, 1.1283791
      %v2249 = vmul.f32 %v1987, %v2248
      %v2250 = vmul.f32 %v2238, 3.8918573e-05
      %v2251 = vadd.f32 %v2250, 0.001143296
      %v2252 = vmul.f32 %v2238, %v2251
      %v2253 = vadd.f32 %v2252, 0.014752088
      %v2254 = vmul.f32 %v2238, %v2253
      %v2255 = vadd.f32 %v2254, 0.112945676
      %v2256 = vmul.f32 %v2238, %v2255
      %v2257 = vadd.f32 %v2256, 0.4994258
      %v2258 = vmul.f32 %v2238, %v2257
      %v2259 = vadd.f32 %v2258, 1.0
      %v2260 = vrcp.pop %v2259
      %v2261 = vmul.f32 %v2259, %v2260
      %v2262 = vsub.f32 1.0, %v2261
      %v2263 = vmul.f32 %v2260, %v2262
      %v2264 = vadd.f32 %v2260, %v2263
      %vm2265 = vweird.f32 %v2259
      %vm2266 = vweird.f32 %v2260
      %vm2267 = vmor %vm2265, %vm2266
      %v2268 = vsel %vm2267, %v2260, %v2264
      %v2269 = vand.u32 2147483647, %v2259
      %vm2270 = vcmp.eq.f32.partialorder %v2269, 8.507059e+37
      %v2271 = vand.u32 %v2259, 2147483648
      %v2272 = vor.u32 1.1754944e-38, %v2271
      %v2273 = vsel %vm2270, %v2272, %v2268
      %v2274 = vmul.f32 %v2249, %v2273
      %v2275 = vmin.f32 %v2274, 1.0
      %v2276 = vmax.f32 %v2275, -1.0
      %v2277 = vmul.f32 %v1988, %v1988
      %v2278 = vmin.f32 16.0, %v2277
      %v2279 = vmul.f32 %v2278, 2.1237322e-06
      %v2280 = vadd.f32 %v2279, 0.00028619796
      %v2281 = vmul.f32 %v2278, %v2280
      %v2282 = vadd.f32 %v2281, 0.0036580483
      %v2283 = vmul.f32 %v2278, %v2282
      %v2284 = vadd.f32 %v2283, 0.05243302
      %v2285 = vmul.f32 %v2278, %v2284
      %v2286 = vadd.f32 %v2285, 0.18741608
      %v2287 = vmul.f32 %v2278, %v2286
      %v2288 = vadd.f32 %v2287, 1.1283791
      %v2289 = vmul.f32 %v1988, %v2288
      %v2290 = vmul.f32 %v2278, 3.8918573e-05
      %v2291 = vadd.f32 %v2290, 0.001143296
      %v2292 = vmul.f32 %v2278, %v2291
      %v2293 = vadd.f32 %v2292, 0.014752088
      %v2294 = vmul.f32 %v2278, %v2293
      %v2295 = vadd.f32 %v2294, 0.112945676
      %v2296 = vmul.f32 %v2278, %v2295
      %v2297 = vadd.f32 %v2296, 0.4994258
      %v2298 = vmul.f32 %v2278, %v2297
      %v2299 = vadd.f32 %v2298, 1.0
      %v2300 = vrcp.pop %v2299
      %v2301 = vmul.f32 %v2299, %v2300
      %v2302 = vsub.f32 1.0, %v2301
      %v2303 = vmul.f32 %v2300, %v2302
      %v2304 = vadd.f32 %v2300, %v2303
      %vm2305 = vweird.f32 %v2299
      %vm2306 = vweird.f32 %v2300
      %vm2307 = vmor %vm2305, %vm2306
      %v2308 = vsel %vm2307, %v2300, %v2304
      %v2309 = vand.u32 2147483647, %v2299
      %vm2310 = vcmp.eq.f32.partialorder %v2309, 8.507059e+37
      %v2311 = vand.u32 %v2299, 2147483648
      %v2312 = vor.u32 1.1754944e-38, %v2311
      %v2313 = vsel %vm2310, %v2312, %v2308
      %v2314 = vmul.f32 %v2289, %v2313
      %v2315 = vmin.f32 %v2314, 1.0
      %v2316 = vmax.f32 %v2315, -1.0
      %v2317 = vmul.f32 %v1989, %v1989
      %v2318 = vmin.f32 16.0, %v2317
      %v2319 = vmul.f32 %v2318, 2.1237322e-06
      %v2320 = vadd.f32 %v2319, 0.00028619796
      %v2321 = vmul.f32 %v2318, %v2320
      %v2322 = vadd.f32 %v2321, 0.0036580483
      %v2323 = vmul.f32 %v2318, %v2322
      %v2324 = vadd.f32 %v2323, 0.05243302
      %v2325 = vmul.f32 %v2318, %v2324
      %v2326 = vadd.f32 %v2325, 0.18741608
      %v2327 = vmul.f32 %v2318, %v2326
      %v2328 = vadd.f32 %v2327, 1.1283791
      %v2329 = vmul.f32 %v1989, %v2328
      %v2330 = vmul.f32 %v2318, 3.8918573e-05
      %v2331 = vadd.f32 %v2330, 0.001143296
      %v2332 = vmul.f32 %v2318, %v2331
      %v2333 = vadd.f32 %v2332, 0.014752088
      %v2334 = vmul.f32 %v2318, %v2333
      %v2335 = vadd.f32 %v2334, 0.112945676
      %v2336 = vmul.f32 %v2318, %v2335
      %v2337 = vadd.f32 %v2336, 0.4994258
      %v2338 = vmul.f32 %v2318, %v2337
      %v2339 = vadd.f32 %v2338, 1.0
      %v2340 = vrcp.pop %v2339
      %v2341 = vmul.f32 %v2339, %v2340
      %v2342 = vsub.f32 1.0, %v2341
      %v2343 = vmul.f32 %v2340, %v2342
      %v2344 = vadd.f32 %v2340, %v2343
      %vm2345 = vweird.f32 %v2339
      %vm2346 = vweird.f32 %v2340
      %vm2347 = vmor %vm2345, %vm2346
      %v2348 = vsel %vm2347, %v2340, %v2344
      %v2349 = vand.u32 2147483647, %v2339
      %vm2350 = vcmp.eq.f32.partialorder %v2349, 8.507059e+37
      %v2351 = vand.u32 %v2339, 2147483648
      %v2352 = vor.u32 1.1754944e-38, %v2351
      %v2353 = vsel %vm2350, %v2352, %v2348
      %v2354 = vmul.f32 %v2329, %v2353
      %v2355 = vmin.f32 %v2354, 1.0
      %v2356 = vmax.f32 %v2355, -1.0
      %v2357 = vmul.f32 %v1990, %v1990
      %v2358 = vmin.f32 16.0, %v2357
      %v2359 = vmul.f32 %v2358, 2.1237322e-06
      %v2360 = vadd.f32 %v2359, 0.00028619796
      %v2361 = vmul.f32 %v2358, %v2360
      %v2362 = vadd.f32 %v2361, 0.0036580483
      %v2363 = vmul.f32 %v2358, %v2362
      %v2364 = vadd.f32 %v2363, 0.05243302
      %v2365 = vmul.f32 %v2358, %v2364
      %v2366 = vadd.f32 %v2365, 0.18741608
      %v2367 = vmul.f32 %v2358, %v2366
      %v2368 = vadd.f32 %v2367, 1.1283791
      %v2369 = vmul.f32 %v1990, %v2368
      %v2370 = vmul.f32 %v2358, 3.8918573e-05
      %v2371 = vadd.f32 %v2370, 0.001143296
      %v2372 = vmul.f32 %v2358, %v2371
      %v2373 = vadd.f32 %v2372, 0.014752088
      %v2374 = vmul.f32 %v2358, %v2373
      %v2375 = vadd.f32 %v2374, 0.112945676
      %v2376 = vmul.f32 %v2358, %v2375
      %v2377 = vadd.f32 %v2376, 0.4994258
      %v2378 = vmul.f32 %v2358, %v2377
      %v2379 = vadd.f32 %v2378, 1.0
      %v2380 = vrcp.pop %v2379
      %v2381 = vmul.f32 %v2379, %v2380
      %v2382 = vsub.f32 1.0, %v2381
      %v2383 = vmul.f32 %v2380, %v2382
      %v2384 = vadd.f32 %v2380, %v2383
      %vm2385 = vweird.f32 %v2379
      %vm2386 = vweird.f32 %v2380
      %vm2387 = vmor %vm2385, %vm2386
      %v2388 = vsel %vm2387, %v2380, %v2384
      %v2389 = vand.u32 2147483647, %v2379
      %vm2390 = vcmp.eq.f32.partialorder %v2389, 8.507059e+37
      %v2391 = vand.u32 %v2379, 2147483648
      %v2392 = vor.u32 1.1754944e-38, %v2391
      %v2393 = vsel %vm2390, %v2392, %v2388
      %v2394 = vmul.f32 %v2369, %v2393
      %v2395 = vmin.f32 %v2394, 1.0
      %v2396 = vmax.f32 %v2395, -1.0
      %v2397 = vmul.f32 %v1991, %v1991
      %v2398 = vmin.f32 16.0, %v2397
      %v2399 = vmul.f32 %v2398, 2.1237322e-06
      %v2400 = vadd.f32 %v2399, 0.00028619796
      %v2401 = vmul.f32 %v2398, %v2400
      %v2402 = vadd.f32 %v2401, 0.0036580483
      %v2403 = vmul.f32 %v2398, %v2402
      %v2404 = vadd.f32 %v2403, 0.05243302
      %v2405 = vmul.f32 %v2398, %v2404
      %v2406 = vadd.f32 %v2405, 0.18741608
      %v2407 = vmul.f32 %v2398, %v2406
      %v2408 = vadd.f32 %v2407, 1.1283791
      %v2409 = vmul.f32 %v1991, %v2408
      %v2410 = vmul.f32 %v2398, 3.8918573e-05
      %v2411 = vadd.f32 %v2410, 0.001143296
      %v2412 = vmul.f32 %v2398, %v2411
      %v2413 = vadd.f32 %v2412, 0.014752088
      %v2414 = vmul.f32 %v2398, %v2413
      %v2415 = vadd.f32 %v2414, 0.112945676
      %v2416 = vmul.f32 %v2398, %v2415
      %v2417 = vadd.f32 %v2416, 0.4994258
      %v2418 = vmul.f32 %v2398, %v2417
      %v2419 = vadd.f32 %v2418, 1.0
      %v2420 = vrcp.pop %v2419
      %v2421 = vmul.f32 %v2419, %v2420
      %v2422 = vsub.f32 1.0, %v2421
      %v2423 = vmul.f32 %v2420, %v2422
      %v2424 = vadd.f32 %v2420, %v2423
      %vm2425 = vweird.f32 %v2419
      %vm2426 = vweird.f32 %v2420
      %vm2427 = vmor %vm2425, %vm2426
      %v2428 = vsel %vm2427, %v2420, %v2424
      %v2429 = vand.u32 2147483647, %v2419
      %vm2430 = vcmp.eq.f32.partialorder %v2429, 8.507059e+37
      %v2431 = vand.u32 %v2419, 2147483648
      %v2432 = vor.u32 1.1754944e-38, %v2431
      %v2433 = vsel %vm2430, %v2432, %v2428
      %v2434 = vmul.f32 %v2409, %v2433
      %v2435 = vmin.f32 %v2434, 1.0
      %v2436 = vmax.f32 %v2435, -1.0
      %v2437 = vmul.f32 %v1992, %v1992
      %v2438 = vmin.f32 16.0, %v2437
      %v2439 = vmul.f32 %v2438, 2.1237322e-06
      %v2440 = vadd.f32 %v2439, 0.00028619796
      %v2441 = vmul.f32 %v2438, %v2440
      %v2442 = vadd.f32 %v2441, 0.0036580483
      %v2443 = vmul.f32 %v2438, %v2442
      %v2444 = vadd.f32 %v2443, 0.05243302
      %v2445 = vmul.f32 %v2438, %v2444
      %v2446 = vadd.f32 %v2445, 0.18741608
      %v2447 = vmul.f32 %v2438, %v2446
      %v2448 = vadd.f32 %v2447, 1.1283791
      %v2449 = vmul.f32 %v1992, %v2448
      %v2450 = vmul.f32 %v2438, 3.8918573e-05
      %v2451 = vadd.f32 %v2450, 0.001143296
      %v2452 = vmul.f32 %v2438, %v2451
      %v2453 = vadd.f32 %v2452, 0.014752088
      %v2454 = vmul.f32 %v2438, %v2453
      %v2455 = vadd.f32 %v2454, 0.112945676
      %v2456 = vmul.f32 %v2438, %v2455
      %v2457 = vadd.f32 %v2456, 0.4994258
      %v2458 = vmul.f32 %v2438, %v2457
      %v2459 = vadd.f32 %v2458, 1.0
      %v2460 = vrcp.pop %v2459
      %v2461 = vmul.f32 %v2459, %v2460
      %v2462 = vsub.f32 1.0, %v2461
      %v2463 = vmul.f32 %v2460, %v2462
      %v2464 = vadd.f32 %v2460, %v2463
      %vm2465 = vweird.f32 %v2459
      %vm2466 = vweird.f32 %v2460
      %vm2467 = vmor %vm2465, %vm2466
      %v2468 = vsel %vm2467, %v2460, %v2464
      %v2469 = vand.u32 2147483647, %v2459
      %vm2470 = vcmp.eq.f32.partialorder %v2469, 8.507059e+37
      %v2471 = vand.u32 %v2459, 2147483648
      %v2472 = vor.u32 1.1754944e-38, %v2471
      %v2473 = vsel %vm2470, %v2472, %v2468
      %v2474 = vmul.f32 %v2449, %v2473
      %v2475 = vmin.f32 %v2474, 1.0
      %v2476 = vmax.f32 %v2475, -1.0
      %v2477 = vmul.f32 %v1993, %v1993
      %v2478 = vmin.f32 16.0, %v2477
      %v2479 = vmul.f32 %v2478, 2.1237322e-06
      %v2480 = vadd.f32 %v2479, 0.00028619796
      %v2481 = vmul.f32 %v2478, %v2480
      %v2482 = vadd.f32 %v2481, 0.0036580483
      %v2483 = vmul.f32 %v2478, %v2482
      %v2484 = vadd.f32 %v2483, 0.05243302
      %v2485 = vmul.f32 %v2478, %v2484
      %v2486 = vadd.f32 %v2485, 0.18741608
      %v2487 = vmul.f32 %v2478, %v2486
      %v2488 = vadd.f32 %v2487, 1.1283791
      %v2489 = vmul.f32 %v1993, %v2488
      %v2490 = vmul.f32 %v2478, 3.8918573e-05
      %v2491 = vadd.f32 %v2490, 0.001143296
      %v2492 = vmul.f32 %v2478, %v2491
      %v2493 = vadd.f32 %v2492, 0.014752088
      %v2494 = vmul.f32 %v2478, %v2493
      %v2495 = vadd.f32 %v2494, 0.112945676
      %v2496 = vmul.f32 %v2478, %v2495
      %v2497 = vadd.f32 %v2496, 0.4994258
      %v2498 = vmul.f32 %v2478, %v2497
      %v2499 = vadd.f32 %v2498, 1.0
      %v2500 = vrcp.pop %v2499
      %v2501 = vmul.f32 %v2499, %v2500
      %v2502 = vsub.f32 1.0, %v2501
      %v2503 = vmul.f32 %v2500, %v2502
      %v2504 = vadd.f32 %v2500, %v2503
      %vm2505 = vweird.f32 %v2499
      %vm2506 = vweird.f32 %v2500
      %vm2507 = vmor %vm2505, %vm2506
      %v2508 = vsel %vm2507, %v2500, %v2504
      %v2509 = vand.u32 2147483647, %v2499
      %vm2510 = vcmp.eq.f32.partialorder %v2509, 8.507059e+37
      %v2511 = vand.u32 %v2499, 2147483648
      %v2512 = vor.u32 1.1754944e-38, %v2511
      %v2513 = vsel %vm2510, %v2512, %v2508
      %v2514 = vmul.f32 %v2489, %v2513
      %v2515 = vmin.f32 %v2514, 1.0
      %v2516 = vmax.f32 %v2515, -1.0
      %v2517 = vmul.f32 %v1994, %v1994
      %v2518 = vmin.f32 16.0, %v2517
      %v2519 = vmul.f32 %v2518, 2.1237322e-06
      %v2520 = vadd.f32 %v2519, 0.00028619796
      %v2521 = vmul.f32 %v2518, %v2520
      %v2522 = vadd.f32 %v2521, 0.0036580483
      %v2523 = vmul.f32 %v2518, %v2522
      %v2524 = vadd.f32 %v2523, 0.05243302
      %v2525 = vmul.f32 %v2518, %v2524
      %v2526 = vadd.f32 %v2525, 0.18741608
      %v2527 = vmul.f32 %v2518, %v2526
      %v2528 = vadd.f32 %v2527, 1.1283791
      %v2529 = vmul.f32 %v1994, %v2528
      %v2530 = vmul.f32 %v2518, 3.8918573e-05
      %v2531 = vadd.f32 %v2530, 0.001143296
      %v2532 = vmul.f32 %v2518, %v2531
      %v2533 = vadd.f32 %v2532, 0.014752088
      %v2534 = vmul.f32 %v2518, %v2533
      %v2535 = vadd.f32 %v2534, 0.112945676
      %v2536 = vmul.f32 %v2518, %v2535
      %v2537 = vadd.f32 %v2536, 0.4994258
      %v2538 = vmul.f32 %v2518, %v2537
      %v2539 = vadd.f32 %v2538, 1.0
      %v2540 = vrcp.pop %v2539
      %v2541 = vmul.f32 %v2539, %v2540
      %v2542 = vsub.f32 1.0, %v2541
      %v2543 = vmul.f32 %v2540, %v2542
      %v2544 = vadd.f32 %v2540, %v2543
      %vm2545 = vweird.f32 %v2539
      %vm2546 = vweird.f32 %v2540
      %vm2547 = vmor %vm2545, %vm2546
      %v2548 = vsel %vm2547, %v2540, %v2544
      %v2549 = vand.u32 2147483647, %v2539
      %vm2550 = vcmp.eq.f32.partialorder %v2549, 8.507059e+37
      %v2551 = vand.u32 %v2539, 2147483648
      %v2552 = vor.u32 1.1754944e-38, %v2551
      %v2553 = vsel %vm2550, %v2552, %v2548
      %v2554 = vmul.f32 %v2529, %v2553
      %v2555 = vmin.f32 %v2554, 1.0
      %v2556 = vmax.f32 %v2555, -1.0
      %v2557 = vmul.f32 %v1995, %v1995
      %v2558 = vmin.f32 16.0, %v2557
      %v2559 = vmul.f32 %v2558, 2.1237322e-06
      %v2560 = vadd.f32 %v2559, 0.00028619796
      %v2561 = vmul.f32 %v2558, %v2560
      %v2562 = vadd.f32 %v2561, 0.0036580483
      %v2563 = vmul.f32 %v2558, %v2562
      %v2564 = vadd.f32 %v2563, 0.05243302
      %v2565 = vmul.f32 %v2558, %v2564
      %v2566 = vadd.f32 %v2565, 0.18741608
      %v2567 = vmul.f32 %v2558, %v2566
      %v2568 = vadd.f32 %v2567, 1.1283791
      %v2569 = vmul.f32 %v1995, %v2568
      %v2570 = vmul.f32 %v2558, 3.8918573e-05
      %v2571 = vadd.f32 %v2570, 0.001143296
      %v2572 = vmul.f32 %v2558, %v2571
      %v2573 = vadd.f32 %v2572, 0.014752088
      %v2574 = vmul.f32 %v2558, %v2573
      %v2575 = vadd.f32 %v2574, 0.112945676
      %v2576 = vmul.f32 %v2558, %v2575
      %v2577 = vadd.f32 %v2576, 0.4994258
      %v2578 = vmul.f32 %v2558, %v2577
      %v2579 = vadd.f32 %v2578, 1.0
      %v2580 = vrcp.pop %v2579
      %v2581 = vmul.f32 %v2579, %v2580
      %v2582 = vsub.f32 1.0, %v2581
      %v2583 = vmul.f32 %v2580, %v2582
      %v2584 = vadd.f32 %v2580, %v2583
      %vm2585 = vweird.f32 %v2579
      %vm2586 = vweird.f32 %v2580
      %vm2587 = vmor %vm2585, %vm2586
      %v2588 = vsel %vm2587, %v2580, %v2584
      %v2589 = vand.u32 2147483647, %v2579
      %vm2590 = vcmp.eq.f32.partialorder %v2589, 8.507059e+37
      %v2591 = vand.u32 %v2579, 2147483648
      %v2592 = vor.u32 1.1754944e-38, %v2591
      %v2593 = vsel %vm2590, %v2592, %v2588
      %v2594 = vmul.f32 %v2569, %v2593
      %v2595 = vmin.f32 %v2594, 1.0
      %v2596 = vmax.f32 %v2595, -1.0
      %v2597 = vmul.f32 %v1996, %v1996
      %v2598 = vmin.f32 16.0, %v2597
      %v2599 = vmul.f32 %v2598, 2.1237322e-06
      %v2600 = vadd.f32 %v2599, 0.00028619796
      %v2601 = vmul.f32 %v2598, %v2600
      %v2602 = vadd.f32 %v2601, 0.0036580483
      %v2603 = vmul.f32 %v2598, %v2602
      %v2604 = vadd.f32 %v2603, 0.05243302
      %v2605 = vmul.f32 %v2598, %v2604
      %v2606 = vadd.f32 %v2605, 0.18741608
      %v2607 = vmul.f32 %v2598, %v2606
      %v2608 = vadd.f32 %v2607, 1.1283791
      %v2609 = vmul.f32 %v1996, %v2608
      %v2610 = vmul.f32 %v2598, 3.8918573e-05
      %v2611 = vadd.f32 %v2610, 0.001143296
      %v2612 = vmul.f32 %v2598, %v2611
      %v2613 = vadd.f32 %v2612, 0.014752088
      %v2614 = vmul.f32 %v2598, %v2613
      %v2615 = vadd.f32 %v2614, 0.112945676
      %v2616 = vmul.f32 %v2598, %v2615
      %v2617 = vadd.f32 %v2616, 0.4994258
      %v2618 = vmul.f32 %v2598, %v2617
      %v2619 = vadd.f32 %v2618, 1.0
      %v2620 = vrcp.pop %v2619
      %v2621 = vmul.f32 %v2619, %v2620
      %v2622 = vsub.f32 1.0, %v2621
      %v2623 = vmul.f32 %v2620, %v2622
      %v2624 = vadd.f32 %v2620, %v2623
      %vm2625 = vweird.f32 %v2619
      %vm2626 = vweird.f32 %v2620
      %vm2627 = vmor %vm2625, %vm2626
      %v2628 = vsel %vm2627, %v2620, %v2624
      %v2629 = vand.u32 2147483647, %v2619
      %vm2630 = vcmp.eq.f32.partialorder %v2629, 8.507059e+37
      %v2631 = vand.u32 %v2619, 2147483648
      %v2632 = vor.u32 1.1754944e-38, %v2631
      %v2633 = vsel %vm2630, %v2632, %v2628
      %v2634 = vmul.f32 %v2609, %v2633
      %v2635 = vmin.f32 %v2634, 1.0
      %v2636 = vmax.f32 %v2635, -1.0
      %v2637 = vadd.f32 %v2036, 1.0
      %v2638 = vadd.f32 %v2076, 1.0
      %v2639 = vadd.f32 %v2116, 1.0
      %v2640 = vadd.f32 %v2156, 1.0
      %v2641 = vadd.f32 %v2196, 1.0
      %v2642 = vadd.f32 %v2236, 1.0
      %v2643 = vadd.f32 %v2276, 1.0
      %v2644 = vadd.f32 %v2316, 1.0
      %v2645 = vadd.f32 %v2356, 1.0
      %v2646 = vadd.f32 %v2396, 1.0
      %v2647 = vadd.f32 %v2436, 1.0
      %v2648 = vadd.f32 %v2476, 1.0
      %v2649 = vadd.f32 %v2516, 1.0
      %v2650 = vadd.f32 %v2556, 1.0
      %v2651 = vadd.f32 %v2596, 1.0
      %v2652 = vadd.f32 %v2636, 1.0
      %v2653 = vmul.f32 %v1965, %v2637
      %v2654 = vmul.f32 %v1966, %v2638
      %v2655 = vmul.f32 %v1967, %v2639
      %v2656 = vmul.f32 %v1968, %v2640
      %v2657 = vmul.f32 %v1969, %v2641
      %v2658 = vmul.f32 %v1970, %v2642
      %v2659 = vmul.f32 %v1971, %v2643
      %v2660 = vmul.f32 %v1972, %v2644
      %v2661 = vmul.f32 %v1973, %v2645
      %v2662 = vmul.f32 %v1974, %v2646
      %v2663 = vmul.f32 %v1975, %v2647
      %v2664 = vmul.f32 %v1976, %v2648
      %v2665 = vmul.f32 %v1977, %v2649
      %v2666 = vmul.f32 %v1978, %v2650
      %v2667 = vmul.f32 %v1979, %v2651
      %v2668 = vmul.f32 %v1980, %v2652
      %v2669 = vpack.c.bf16 %v2654, %v2653
      %v2670 = vpack.c.bf16 %v2656, %v2655
      %v2671 = vpack.c.bf16 %v2658, %v2657
      %v2672 = vpack.c.bf16 %v2660, %v2659
      %v2673 = vpack.c.bf16 %v2662, %v2661
      %v2674 = vpack.c.bf16 %v2664, %v2663
      %v2675 = vpack.c.bf16 %v2666, %v2665
      %v2676 = vpack.c.bf16 %v2668, %v2667
      %v2677 = vld [vmem:[%s5] sm:$0xf]
      %v2678 = vld [vmem:[%s5 + $0x4] sm:$0xf]
      %v2681 = vunpack.c.l.b16 %v2677
      %v2682 = vunpack.c.l.b16 %v2678
      %v2683 = vpack.c.b16 %v2682, %v2681
      %v2686 = vsel %vm1259, %v2669, 0
      %v2689 = vsel %vm1259, %v2670, 0
      %v2692 = vsel %vm1259, %v2671, 0
      %v2695 = vsel %vm1259, %v2672, 0
      %v2698 = vsel %vm1259, %v2673, 0
      %v2701 = vsel %vm1259, %v2674, 0
      %v2704 = vsel %vm1259, %v2675, 0
      %v2707 = vsel %vm1259, %v2676, 0
      %2709 = vmatpush.bf16.msra.mxu0 0
      %2710 = vmatpush.bf16.msra.mxu0 0
      %2711 = vmatpush.bf16.msra.mxu0 0
      %2712 = vmatpush.bf16.msra.mxu0 0
      %2713 = vmatpush.bf16.msra.mxu0 0
      %2714 = vmatpush.bf16.msra.mxu0 0
      %2715 = vmatpush.bf16.msra.mxu0 0
      %2716 = vmatpush.bf16.msra.mxu0 %v2683
      %2717 = vmatmul.bf16.gmra.mxu0 %v2686
      %v2718 = vpop.f32.mrf.mxu0
      %v2719 = vadd.f32 0.0, %v2718
      %v2720 = vpop.f32.mrf.mxu0
      %v2721 = vadd.f32 0.0, %v2720
      %2722 = vmatmul.bf16.gmra.mxu0 %v2689
      %v2723 = vpop.f32.mrf.mxu0
      %v2724 = vadd.f32 0.0, %v2723
      %v2725 = vpop.f32.mrf.mxu0
      %v2726 = vadd.f32 0.0, %v2725
      %2727 = vmatmul.bf16.gmra.mxu0 %v2692
      %v2728 = vpop.f32.mrf.mxu0
      %v2729 = vadd.f32 0.0, %v2728
      %v2730 = vpop.f32.mrf.mxu0
      %v2731 = vadd.f32 0.0, %v2730
      %2732 = vmatmul.bf16.gmra.mxu0 %v2695
      %v2733 = vpop.f32.mrf.mxu0
      %v2734 = vadd.f32 0.0, %v2733
      %v2735 = vpop.f32.mrf.mxu0
      %v2736 = vadd.f32 0.0, %v2735
      %2737 = vmatmul.bf16.gmra.mxu0 %v2698
      %v2738 = vpop.f32.mrf.mxu0
      %v2739 = vadd.f32 0.0, %v2738
      %v2740 = vpop.f32.mrf.mxu0
      %v2741 = vadd.f32 0.0, %v2740
      %2742 = vmatmul.bf16.gmra.mxu0 %v2701
      %v2743 = vpop.f32.mrf.mxu0
      %v2744 = vadd.f32 0.0, %v2743
      %v2745 = vpop.f32.mrf.mxu0
      %v2746 = vadd.f32 0.0, %v2745
      %2747 = vmatmul.bf16.gmra.mxu0 %v2704
      %v2748 = vpop.f32.mrf.mxu0
      %v2749 = vadd.f32 0.0, %v2748
      %v2750 = vpop.f32.mrf.mxu0
      %v2751 = vadd.f32 0.0, %v2750
      %2752 = vmatmul.bf16.gmra.mxu0 %v2707
      %v2753 = vpop.f32.mrf.mxu0
      %v2754 = vadd.f32 0.0, %v2753
      %v2755 = vpop.f32.mrf.mxu0
      %v2756 = vadd.f32 0.0, %v2755
      %2757 = vdwg.mxu0
      %2758 = vst.msk [vmem:[%s417] sm:$0xff] %vm477, %v2719
      %2759 = vst.msk [vmem:[%s417 + $0x8] sm:$0xff] %vm477, %v2721
      %2760 = vst.msk [vmem:[%s417 + $0x10] sm:$0xff] %vm477, %v2724
      %2761 = vst.msk [vmem:[%s417 + $0x18] sm:$0xff] %vm477, %v2726
      %2762 = vst.msk [vmem:[%s417 + $0x20] sm:$0xff] %vm477, %v2729
      %2763 = vst.msk [vmem:[%s417 + $0x28] sm:$0xff] %vm477, %v2731
      %2764 = vst.msk [vmem:[%s417 + $0x30] sm:$0xff] %vm477, %v2734
      %2765 = vst.msk [vmem:[%s417 + $0x38] sm:$0xff] %vm477, %v2736
      %2766 = vst.msk [vmem:[%s417 + $0x40] sm:$0xff] %vm477, %v2739
      %2767 = vst.msk [vmem:[%s417 + $0x48] sm:$0xff] %vm477, %v2741
      %2768 = vst.msk [vmem:[%s417 + $0x50] sm:$0xff] %vm477, %v2744
      %2769 = vst.msk [vmem:[%s417 + $0x58] sm:$0xff] %vm477, %v2746
      %2770 = vst.msk [vmem:[%s417 + $0x60] sm:$0xff] %vm477, %v2749
      %2771 = vst.msk [vmem:[%s417 + $0x68] sm:$0xff] %vm477, %v2751
      %2772 = vst.msk [vmem:[%s417 + $0x70] sm:$0xff] %vm477, %v2754
      %2773 = vst.msk [vmem:[%s417 + $0x78] sm:$0xff] %vm477, %v2756
      %s2774 = smul.u32 16, %s22
      %p2775 = scmp.lt.s32.totalorder %s21, 1
      %s2776 = scalar_select %p2775, %s21, 1
      %p2777 = scmp.lt.s32.totalorder %s2774, 31
      %s2778 = scalar_select %p2777, %s2774, 31
      %s2779 = smul.addr %s2776, 32
      %s2780 = sadd.s32 %s2778, %s2779
      %s2781 = smul.addr %s2780, 8
      %s2782 = scalar_lea.vmem %s6, %s2781
      // Predicated region
      $region61: #{tpu_custom_call.1} parent=43 // pred_check
        %p2783 = pneg %p212
      $region62: #{tpu_custom_call.1} parent=43 // pred_check_branch
        %2785 = sbr.rel (%p2783) target = $region64
      $region63: #{tpu_custom_call.1} parent=43 // pred_region
        %s2786 = smul.u32 16, %s22
      $region64: #{tpu_custom_call.1} parent=43 // pred_fallthru
        _
    $region44: #{tpu_custom_call.1} parent=5 // pred_fallthru
      _
    %p2787 = scmp.le.s32.totalorder 2, %s12
    // Predicated region
    $region65: #{tpu_custom_call.1} parent=5 // pred_check
      %p2788 = pneg %p2787
    $region66: #{tpu_custom_call.1} parent=5 // pred_check_branch
      %2790 = sbr.rel (%p2788) target = $region68
    $region67: #{tpu_custom_call.1} parent=5 // pred_region
      %s2791 = ssub.s32 %s12, 2
      // Predicated region
      $region69: #{tpu_custom_call.1} parent=67 // pred_check
        %p2792 = pneg %p218
      $region70: #{tpu_custom_call.1} parent=67 // pred_check_branch
        %2794 = sbr.rel (%p2792) target = $region72
      $region71: #{tpu_custom_call.1} parent=67 // pred_region
        %s2795 = smul.u32 16, %s24
        %p2796 = scmp.lt.s32.totalorder %s23, 1
        %s2797 = scalar_select %p2796, %s23, 1
        %p2798 = scmp.lt.s32.totalorder %s2795, 31
        %s2799 = scalar_select %p2798, %s2795, 31
        %s2800 = smul.addr %s2797, 32
        %s2801 = sadd.s32 %s2799, %s2800
        %s2802 = smul.addr %s2801, 8
        %s2803 = scalar_lea.vmem %s6, %s2802
      $region72: #{tpu_custom_call.1} parent=67 // pred_fallthru
        _
    $region68: #{tpu_custom_call.1} parent=5 // pred_fallthru
      _
  $region6: #{tpu_custom_call.1} parent=0 // loop_footer
    %s16 = sadd.s32 1, %s12
  $region7: #{tpu_custom_call.1} parent=0 // loop_footer_branch
    %11 = sbr.rel target = $region3
  $region8: #{tpu_custom_call.1} parent=0 // loop_exit
    _

</llo_original>
